<compile_context>
chip_gen: v5e
topology: v5e:2x2
jax: 0.10.0
libtpu: 0.0.40
codegen_flags: <defaults>
</compile_context>

<pallas_src>
import functools

import jax
import jax.numpy as jnp
from jax.experimental import pallas as pl
from jax.experimental.pallas import tpu as pltpu


def _round_up(x, m):
    return ((x + m - 1) // m) * m


# ----------------------------------------------------------------------------
# Fused Pallas kernel: whole ConvFCBBoxHead forward on one (tm, :) row tile.
# refs = (x_ref, w0, b0, w1, b1, ..., w_head, b_head, o_ref)
# All weights are full-extent VMEM-resident blocks; activations stay in vregs.
# ----------------------------------------------------------------------------
def _fused_head_kernel(*refs, num_shared_fcs):
    x_ref = refs[0]
    o_ref = refs[-1]
    params = refs[1:-1]  # (w, b) pairs: shared FCs then the fused cls||reg head

    # f32 HBM tile -> bf16 inside the kernel (no wrapper-side pad/cast round trip).
    h = x_ref[...].astype(jnp.bfloat16)
    for li in range(num_shared_fcs):
        w_ref = params[2 * li]
        b_ref = params[2 * li + 1]
        # bf16 x bf16 -> f32 on the MXU; bias + ReLU epilogue in f32 (v5e-safe).
        a = jnp.dot(h, w_ref[...], preferred_element_type=jnp.float32)
        a = jnp.maximum(a + b_ref[...], 0.0)
        h = a.astype(jnp.bfloat16)  # back to bf16 for the next MXU pass

    wh_ref = params[-2]
    bh_ref = params[-1]
    y = jnp.dot(h, wh_ref[...], preferred_element_type=jnp.float32) + bh_ref[...]
    o_ref[...] = y.astype(o_ref.dtype)  # lane-dense (tm, 128*k) unmasked store


def _fused_head_pallas(x_flat, packed_params, *, out_dim_padded, tm):
    """One pallas_call for the whole head.

    x_flat        : (M, K) f32 flattened ROI features (fed straight to the kernel).
    packed_params : tuple of (w_p, b_p); w_p bf16 (Kin, Kout_p), b_p f32 (1, Kout_p).
                    The last entry is the fused cls||reg head.
    """
    M, K = x_flat.shape
    Mp = _round_up(max(M, 1), tm)
    if Mp > M:  # static python branch; no-op when M already tiles evenly
        x_flat = jnp.pad(x_flat, ((0, Mp - M), (0, 0)))

    num_shared_fcs = len(packed_params) - 1
    grid = (Mp // tm,)

    # x block: full-extent K (allowed: equals the full array dim), rows tiled by tm.
    in_specs = [pl.BlockSpec((tm, K), lambda i: (i, 0))]
    flat_params = []
    flops = 0
    weight_bytes = 0
    for (w_p, b_p) in packed_params:
        kin, kout = w_p.shape
        in_specs.append(pl.BlockSpec((kin, kout), lambda i: (0, 0)))  # VMEM-resident
        in_specs.append(pl.BlockSpec((1, kout), lambda i: (0, 0)))
        flat_params.extend([w_p, b_p])
        flops += 2 * Mp * kin * kout
        weight_bytes += (w_p.size * w_p.dtype.itemsize
                         + b_p.size * b_p.dtype.itemsize)

    bytes_accessed = Mp * K * 4 + weight_bytes + Mp * out_dim_padded * 4

    out = pl.pallas_call(
        functools.partial(_fused_head_kernel, num_shared_fcs=num_shared_fcs),
        out_shape=jax.ShapeDtypeStruct((Mp, out_dim_padded), jnp.float32),
        grid_spec=pltpu.PrefetchScalarGridSpec(
            num_scalar_prefetch=0,
            grid=grid,
            in_specs=in_specs,
            out_specs=pl.BlockSpec((tm, out_dim_padded), lambda i: (i, 0)),
        ),
        compiler_params=pltpu.CompilerParams(
            dimension_semantics=("parallel",),  # megacore shards the M axis on v7x
        ),
        cost_estimate=pl.CostEstimate(
            flops=flops, transcendentals=0, bytes_accessed=bytes_accessed),
    )(x_flat, *flat_params)
    return out


@functools.partial(
    jax.jit, static_argnames=("out_dim_padded", "tm", "num_classes", "reg_dim"))
def _forward_jit(x, packed_params, *, out_dim_padded, tm, num_classes, reg_dim):
    """Whole forward (flatten -> fused head -> cls/reg slices) under one jit."""
    n = x.shape[0]
    x_flat = x.reshape(n, -1).astype(jnp.float32)  # matches torch x.view(x.size(0), -1)
    out = _fused_head_pallas(
        x_flat, packed_params, out_dim_padded=out_dim_padded, tm=tm)
    cls_score = out[:n, :num_classes]
    bbox_pred = out[:n, num_classes:num_classes + reg_dim]
    return cls_score, bbox_pred


def _select_tm(m):
    """Per-generation row-tile choice (static, trace-time)."""
    mp8 = _round_up(max(m, 1), 8)
    kind = ""
    try:
        kind = jax.devices()[0].device_kind.lower()
    except Exception:  # pragma: no cover - defensive, fall back to single-TC path
        pass
    two_tensorcores = "v7" in kind  # megacore chips: 2 TCs/chip
    if two_tensorcores:
        if mp8 <= 256:
            # >=2 row blocks so the 'parallel' axis uses both TensorCores.
            return max(8, _round_up((mp8 + 1) // 2, 8))
        # large M: 128-row tiles -> >=2 steps per core, x-tile DMA overlaps compute
        return 128
    # single-TC v5e/v6e: collapse to one grid step for typical ROI counts
    # (~0.35us fixed overhead per step); 256-row tiles once M is large.
    return mp8 if mp8 <= 512 else 256


# ----------------------------------------------------------------------------
# ConvFCBBoxHead (forward only) with deterministic synthetic parameters
# ----------------------------------------------------------------------------
class ConvFCBBoxHeadPallas:
    def __init__(
        self,
        num_shared_fcs=2,
        fc_out_channels=128,
        roi_feat_size=7,
        in_channels=16,
        num_classes=8,
        reg_class_agnostic=False,
        key=jax.random.PRNGKey(42),
    ):
        # TODO(synk): num_cls_convs/num_reg_convs conv branches, num_cls_fcs/num_reg_fcs
        # branch FCs and with_avg_pool are 0/False in the default config and not implemented.
        assert num_shared_fcs >= 1
        self.num_shared_fcs = num_shared_fcs
        self.roi_feat_area = roi_feat_size * roi_feat_size
        self.in_channels = in_channels
        self.fc_out_channels = fc_out_channels
        self.num_classes = num_classes
        self.reg_class_agnostic = reg_class_agnostic
        self.reg_dim = 4 if reg_class_agnostic else 4 * num_classes

        def xavier(k, fan_in, fan_out):
            # xavier_uniform_: U(-a, a), a = sqrt(6 / (fan_in + fan_out)),
            # stored as (fan_in, fan_out) == W.T for the kernel's x @ Wt.
            a = (6.0 / (fan_in + fan_out)) ** 0.5
            return jax.random.uniform(
                k, (fan_in, fan_out), jnp.float32, minval=-a, maxval=a)

        keys = jax.random.split(key, num_shared_fcs + 2)

        # f32 unpadded parameters (used by the pure-JAX reference).
        self.shared_fcs = []
        last_dim = in_channels * self.roi_feat_area
        for i in range(num_shared_fcs):
            wt = xavier(keys[i], last_dim, fc_out_channels)
            b = jnp.zeros((fc_out_channels,), jnp.float32)
            self.shared_fcs.append((wt, b))
            last_dim = fc_out_channels
        self.fc_cls = (
            xavier(keys[num_shared_fcs], last_dim, num_classes),
            jnp.zeros((num_classes,), jnp.float32),
        )
        self.fc_reg = (
            xavier(keys[num_shared_fcs + 1], last_dim, self.reg_dim),
            jnp.zeros((self.reg_dim,), jnp.float32),
        )

        # ---- Precompute bf16 weight slabs + f32 biases ONCE (not per call). ----
        # K (=784 here) is NOT padded: the kernel consumes the full-extent input
        # block directly.  Only output lanes are padded to multiples of 128.
        packed = []
        prev_in = in_channels * self.roi_feat_area  # no padding on fc0's input rows
        for wt, b in self.shared_fcs:
            kin, kout = wt.shape
            kout_p = _round_up(kout, 128)
            w_p = (
                jnp.zeros((prev_in, kout_p), jnp.bfloat16)
                .at[:kin, :kout]
                .set(wt.astype(jnp.bfloat16))
            )
            b_p = jnp.zeros((1, kout_p), jnp.float32).at[0, :kout].set(b)
            packed.append((w_p, b_p))
            prev_in = kout_p

        # Fuse fc_cls and fc_reg into one lane-dense (last_dim, 128*k) head matmul.
        wh = jnp.concatenate([self.fc_cls[0], self.fc_reg[0]], axis=1)
        bh = jnp.concatenate([self.fc_cls[1], self.fc_reg[1]], axis=0)
        kin, kout = wh.shape
        self.head_dim = kout
        self.head_dim_p = _round_up(kout, 128)
        wh_p = (
            jnp.zeros((prev_in, self.head_dim_p), jnp.bfloat16)
            .at[:kin, :kout]
            .set(wh.astype(jnp.bfloat16))
        )
        bh_p = jnp.zeros((1, self.head_dim_p), jnp.float32).at[0, :kout].set(bh)
        packed.append((wh_p, bh_p))
        self.packed_params = tuple(packed)

    def __call__(self, x):
        # x: (N, C, H, W) NCHW, same as the PyTorch module input.
        tm = _select_tm(x.shape[0])
        return _forward_jit(
            x,
            self.packed_params,
            out_dim_padded=self.head_dim_p,
            tm=tm,
            num_classes=self.num_classes,
            reg_dim=self.reg_dim,
        )

    # Pure-JAX f32 reference for verification.
    def reference(self, x):
        n = x.shape[0]
        x = x.reshape(n, -1).astype(jnp.float32)
        for wt, b in self.shared_fcs:
            x = jnp.maximum(x @ wt + b, 0.0)
        cls_score = x @ self.fc_cls[0] + self.fc_cls[1]
        bbox_pred = x @ self.fc_reg[0] + self.fc_reg[1]
        return cls_score, bbox_pred


if __name__ == "__main__":
    key = jax.random.PRNGKey(0)
    # 256 ROIs (typical per-image sample count): one grid step on single-TC
    # v5e/v6e, two 128-row blocks on v7x so both TensorCores engage.
    batch, in_channels, roi, num_classes = 256, 16, 7, 8
    x = jax.random.normal(key, (batch, in_channels, roi, roi), jnp.float32)

    head = ConvFCBBoxHeadPallas(
        num_shared_fcs=2,
        fc_out_channels=128,
        roi_feat_size=roi,
        in_channels=in_channels,
        num_classes=num_classes,
        reg_class_agnostic=False,
        key=jax.random.PRNGKey(42),
    )

    cls_score, bbox_pred = head(x)
    cls_score = jax.block_until_ready(cls_score)
    bbox_pred = jax.block_until_ready(bbox_pred)

    ref_cls, ref_reg = head.reference(x)
    assert cls_score.shape == (batch, num_classes)
    assert bbox_pred.shape == (batch, 4 * num_classes)
    # bf16 MXU operands (f32 accumulation) -> looser tolerance than a pure-f32 pipeline.
    assert jnp.allclose(cls_score, ref_cls, atol=5e-2, rtol=5e-2)
    assert jnp.allclose(bbox_pred, ref_reg, atol=5e-2, rtol=5e-2)

    print("KERNEL_OK")
</pallas_src>

<mosaic_0001>
module attributes {stable_mosaic.version = 11 : i64} {
  func.func @_fused_head_kernel(%arg0: i32, %arg1: memref<256x784xf32, #tpu.memory_space<vmem>>, %arg2: memref<784x128xbf16, #tpu.memory_space<vmem>>, %arg3: memref<1x128xf32, #tpu.memory_space<vmem>>, %arg4: memref<128x128xbf16, #tpu.memory_space<vmem>>, %arg5: memref<1x128xf32, #tpu.memory_space<vmem>>, %arg6: memref<128x128xbf16, #tpu.memory_space<vmem>>, %arg7: memref<1x128xf32, #tpu.memory_space<vmem>>, %arg8: memref<256x128xf32, #tpu.memory_space<vmem>>) attributes {dimension_semantics = [#tpu.dimension_semantics<parallel>], iteration_bounds = array<i64: 1>, scalar_prefetch = 0 : i64, scratch_operands = 0 : i64, tpu.core_type = #tpu.core_type<tc>, window_params = [{transform_indices = @transform_0, window_bounds = array<i64: 256, 784>}, {pipeline_mode = #tpu.pipeline_mode<synchronous>, transform_indices = @transform_1, window_bounds = array<i64: 784, 128>}, {pipeline_mode = #tpu.pipeline_mode<synchronous>, transform_indices = @transform_2, window_bounds = array<i64: 1, 128>}, {pipeline_mode = #tpu.pipeline_mode<synchronous>, transform_indices = @transform_3, window_bounds = array<i64: 128, 128>}, {pipeline_mode = #tpu.pipeline_mode<synchronous>, transform_indices = @transform_4, window_bounds = array<i64: 1, 128>}, {pipeline_mode = #tpu.pipeline_mode<synchronous>, transform_indices = @transform_5, window_bounds = array<i64: 128, 128>}, {pipeline_mode = #tpu.pipeline_mode<synchronous>, transform_indices = @transform_6, window_bounds = array<i64: 1, 128>}, {transform_indices = @transform_7, window_bounds = array<i64: 256, 128>}]} {
    %c0 = arith.constant 0 : index
    %c0_0 = arith.constant 0 : index
    %0 = vector.load %arg1[%c0, %c0_0] : memref<256x784xf32, #tpu.memory_space<vmem>>, vector<256x784xf32>
    %1 = arith.truncf %0 : vector<256x784xf32> to vector<256x784xbf16>
    %c0_1 = arith.constant 0 : index
    %c0_2 = arith.constant 0 : index
    %2 = vector.load %arg2[%c0_1, %c0_2] : memref<784x128xbf16, #tpu.memory_space<vmem>>, vector<784x128xbf16>
    %cst = arith.constant dense<0.000000e+00> : vector<256x128xf32>
    %3 = tpu.matmul %1, %2, %cst {dimension_numbers = #tpu.dot_dimension_numbers<[1], [0], [0], [1], [0, 0, 1, 1], [], []>} : vector<256x784xbf16>, vector<784x128xbf16>, vector<256x128xf32> -> vector<256x128xf32>
    %c0_3 = arith.constant 0 : index
    %c0_4 = arith.constant 0 : index
    %4 = vector.load %arg3[%c0_3, %c0_4] : memref<1x128xf32, #tpu.memory_space<vmem>>, vector<1x128xf32>
    %5 = vector.broadcast %4 : vector<1x128xf32> to vector<256x128xf32>
    %6 = arith.addf %3, %5 : vector<256x128xf32>
    %cst_5 = arith.constant 0.000000e+00 : f32
    %7 = vector.broadcast %cst_5 : f32 to vector<256x128xf32>
    %8 = arith.maximumf %6, %7 : vector<256x128xf32>
    %9 = arith.truncf %8 : vector<256x128xf32> to vector<256x128xbf16>
    %c0_6 = arith.constant 0 : index
    %c0_7 = arith.constant 0 : index
    %10 = vector.load %arg4[%c0_6, %c0_7] : memref<128x128xbf16, #tpu.memory_space<vmem>>, vector<128x128xbf16>
    %cst_8 = arith.constant dense<0.000000e+00> : vector<256x128xf32>
    %11 = tpu.matmul %9, %10, %cst_8 {dimension_numbers = #tpu.dot_dimension_numbers<[1], [0], [0], [1], [0, 0, 1, 1], [], []>} : vector<256x128xbf16>, vector<128x128xbf16>, vector<256x128xf32> -> vector<256x128xf32>
    %c0_9 = arith.constant 0 : index
    %c0_10 = arith.constant 0 : index
    %12 = vector.load %arg5[%c0_9, %c0_10] : memref<1x128xf32, #tpu.memory_space<vmem>>, vector<1x128xf32>
    %13 = vector.broadcast %12 : vector<1x128xf32> to vector<256x128xf32>
    %14 = arith.addf %11, %13 : vector<256x128xf32>
    %cst_11 = arith.constant 0.000000e+00 : f32
    %15 = vector.broadcast %cst_11 : f32 to vector<256x128xf32>
    %16 = arith.maximumf %14, %15 : vector<256x128xf32>
    %17 = arith.truncf %16 : vector<256x128xf32> to vector<256x128xbf16>
    %c0_12 = arith.constant 0 : index
    %c0_13 = arith.constant 0 : index
    %18 = vector.load %arg6[%c0_12, %c0_13] : memref<128x128xbf16, #tpu.memory_space<vmem>>, vector<128x128xbf16>
    %cst_14 = arith.constant dense<0.000000e+00> : vector<256x128xf32>
    %19 = tpu.matmul %17, %18, %cst_14 {dimension_numbers = #tpu.dot_dimension_numbers<[1], [0], [0], [1], [0, 0, 1, 1], [], []>} : vector<256x128xbf16>, vector<128x128xbf16>, vector<256x128xf32> -> vector<256x128xf32>
    %c0_15 = arith.constant 0 : index
    %c0_16 = arith.constant 0 : index
    %20 = vector.load %arg7[%c0_15, %c0_16] : memref<1x128xf32, #tpu.memory_space<vmem>>, vector<1x128xf32>
    %21 = vector.broadcast %20 : vector<1x128xf32> to vector<256x128xf32>
    %22 = arith.addf %19, %21 : vector<256x128xf32>
    %c0_17 = arith.constant 0 : index
    %c0_18 = arith.constant 0 : index
    %23 = vector.load %arg8[%c0_17, %c0_18] : memref<256x128xf32, #tpu.memory_space<vmem>>, vector<256x128xf32>
    tpu.vector_store %arg8[%c0_17, %c0_18], %22 {strides = array<i32>} : memref<256x128xf32, #tpu.memory_space<vmem>>, vector<256x128xf32>,
    return
  }
  func.func @transform_0(%arg0: i32) -> (i32, i32) {
    %c0_i32 = arith.constant 0 : i32
    %c0_i32_0 = arith.constant 0 : i32
    return %arg0, %c0_i32 : i32, i32
  }
  func.func @transform_1(%arg0: i32) -> (i32, i32) {
    %c0_i32 = arith.constant 0 : i32
    %c0_i32_0 = arith.constant 0 : i32
    %c0_i32_1 = arith.constant 0 : i32
    return %c0_i32, %c0_i32_0 : i32, i32
  }
  func.func @transform_2(%arg0: i32) -> (i32, i32) {
    %c0_i32 = arith.constant 0 : i32
    %c0_i32_0 = arith.constant 0 : i32
    %c0_i32_1 = arith.constant 0 : i32
    return %c0_i32, %c0_i32_0 : i32, i32
  }
  func.func @transform_3(%arg0: i32) -> (i32, i32) {
    %c0_i32 = arith.constant 0 : i32
    %c0_i32_0 = arith.constant 0 : i32
    %c0_i32_1 = arith.constant 0 : i32
    return %c0_i32, %c0_i32_0 : i32, i32
  }
  func.func @transform_4(%arg0: i32) -> (i32, i32) {
    %c0_i32 = arith.constant 0 : i32
    %c0_i32_0 = arith.constant 0 : i32
    %c0_i32_1 = arith.constant 0 : i32
    return %c0_i32, %c0_i32_0 : i32, i32
  }
  func.func @transform_5(%arg0: i32) -> (i32, i32) {
    %c0_i32 = arith.constant 0 : i32
    %c0_i32_0 = arith.constant 0 : i32
    %c0_i32_1 = arith.constant 0 : i32
    return %c0_i32, %c0_i32_0 : i32, i32
  }
  func.func @transform_6(%arg0: i32) -> (i32, i32) {
    %c0_i32 = arith.constant 0 : i32
    %c0_i32_0 = arith.constant 0 : i32
    %c0_i32_1 = arith.constant 0 : i32
    return %c0_i32, %c0_i32_0 : i32, i32
  }
  func.func @transform_7(%arg0: i32) -> (i32, i32) {
    %c0_i32 = arith.constant 0 : i32
    %c0_i32_0 = arith.constant 0 : i32
    return %arg0, %c0_i32 : i32, i32
  }
}

</mosaic_0001>

<llo_original>
// kernel: _forward_jit.1
$region0: #{_forward_jit.1}
  #allocation0 [shape = 'u32[]', space=smem, size = 0x4, offset = 0x4, fixed_abs, tag = 'smem constant byte address 0x4 - core index']
  #allocation1 [shape = 'u32[72,128]{1,0:T(1,128)}', space=vmem, size = 0x9000, scoped, tag = 'internal scratch']
  %s0 = inlined_call_operand.vmem [shape: f32[256,784], index: 0, kind: input, shape index: {}]
  %s1 = inlined_call_operand.vmem [shape: bf16[784,128], index: 1, kind: input, shape index: {}]
  %s2 = inlined_call_operand.vmem [shape: f32[1,128], index: 2, kind: input, shape index: {}]
  %s3 = inlined_call_operand.vmem [shape: bf16[128,128], index: 3, kind: input, shape index: {}]
  %s4 = inlined_call_operand.vmem [shape: f32[1,128], index: 4, kind: input, shape index: {}]
  %s5 = inlined_call_operand.vmem [shape: bf16[128,128], index: 5, kind: input, shape index: {}]
  %s6 = inlined_call_operand.vmem [shape: f32[1,128], index: 6, kind: input, shape index: {}]
  %s7 = inlined_call_operand.vmem [shape: f32[256,128], index: 7, kind: output, shape index: {}]
  %s8 = sld [smem:[#allocation0]]
  $region38: #{_forward_jit.1} parent=0
    _
  %s10 = ssub.s32 1, %s8
  %s11 = scalar_select 0, %s10, %s8
  // Predicated region
  $region2: #{_forward_jit.1} parent=0 // pred_check
    _
  $region3: #{_forward_jit.1} parent=0 // pred_check_branch
    %13 = sbr.rel (0) target = $region5
  $region4: #{_forward_jit.1} parent=0 // pred_region
    _
  $region5: #{_forward_jit.1} parent=0 // pred_fallthru
    _
  // Predicated region
  $region6: #{_forward_jit.1} parent=0 // pred_check
    _
  $region7: #{_forward_jit.1} parent=0 // pred_check_branch
    %15 = sbr.rel (0) target = $region9
  $region8: #{_forward_jit.1} parent=0 // pred_region
    _
  $region9: #{_forward_jit.1} parent=0 // pred_fallthru
    _
  // Predicated region
  $region10: #{_forward_jit.1} parent=0 // pred_check
    _
  $region11: #{_forward_jit.1} parent=0 // pred_check_branch
    %17 = sbr.rel (0) target = $region13
  $region12: #{_forward_jit.1} parent=0 // pred_region
    _
  $region13: #{_forward_jit.1} parent=0 // pred_fallthru
    _
  // Predicated region
  $region14: #{_forward_jit.1} parent=0 // pred_check
    _
  $region15: #{_forward_jit.1} parent=0 // pred_check_branch
    %19 = sbr.rel (0) target = $region17
  $region16: #{_forward_jit.1} parent=0 // pred_region
    _
  $region17: #{_forward_jit.1} parent=0 // pred_fallthru
    _
  // Predicated region
  $region18: #{_forward_jit.1} parent=0 // pred_check
    _
  $region19: #{_forward_jit.1} parent=0 // pred_check_branch
    %21 = sbr.rel (0) target = $region21
  $region20: #{_forward_jit.1} parent=0 // pred_region
    _
  $region21: #{_forward_jit.1} parent=0 // pred_fallthru
    _
  // Predicated region
  $region22: #{_forward_jit.1} parent=0 // pred_check
    _
  $region23: #{_forward_jit.1} parent=0 // pred_check_branch
    %23 = sbr.rel (0) target = $region25
  $region24: #{_forward_jit.1} parent=0 // pred_region
    _
  $region25: #{_forward_jit.1} parent=0 // pred_fallthru
    _
  // Predicated region
  $region26: #{_forward_jit.1} parent=0 // pred_check
    _
  $region27: #{_forward_jit.1} parent=0 // pred_check_branch
    %25 = sbr.rel (0) target = $region29
  $region28: #{_forward_jit.1} parent=0 // pred_region
    _
  $region29: #{_forward_jit.1} parent=0 // pred_fallthru
    _
  %v27 = vld [vmem:[%s0] sm:$0xff]
  %v28 = vld [vmem:[%s0 + $0x8] sm:$0xff]
  %v29 = vld [vmem:[%s0 + $0x10] sm:$0xff]
  %v30 = vld [vmem:[%s0 + $0x18] sm:$0xff]
  %v31 = vld [vmem:[%s0 + $0x20] sm:$0xff]
  %v32 = vld [vmem:[%s0 + $0x28] sm:$0xff]
  %v33 = vld [vmem:[%s0 + $0x30] sm:$0xff]
  %v34 = vld [vmem:[%s0 + $0x38] sm:$0xff]
  %v35 = vld [vmem:[%s0 + $0x40] sm:$0xff]
  %v36 = vld [vmem:[%s0 + $0x48] sm:$0xff]
  %v37 = vld [vmem:[%s0 + $0x50] sm:$0xff]
  %v38 = vld [vmem:[%s0 + $0x58] sm:$0xff]
  %v39 = vld [vmem:[%s0 + $0x60] sm:$0xff]
  %v40 = vld [vmem:[%s0 + $0x68] sm:$0xff]
  %v41 = vld [vmem:[%s0 + $0x70] sm:$0xff]
  %v42 = vld [vmem:[%s0 + $0x78] sm:$0xff]
  %v43 = vld [vmem:[%s0 + $0x80] sm:$0xff]
  %v44 = vld [vmem:[%s0 + $0x88] sm:$0xff]
  %v45 = vld [vmem:[%s0 + $0x90] sm:$0xff]
  %v46 = vld [vmem:[%s0 + $0x98] sm:$0xff]
  %v47 = vld [vmem:[%s0 + $0xa0] sm:$0xff]
  %v48 = vld [vmem:[%s0 + $0xa8] sm:$0xff]
  %v49 = vld [vmem:[%s0 + $0xb0] sm:$0xff]
  %v50 = vld [vmem:[%s0 + $0xb8] sm:$0xff]
  %v51 = vld [vmem:[%s0 + $0xc0] sm:$0xff]
  %v52 = vld [vmem:[%s0 + $0xc8] sm:$0xff]
  %v53 = vld [vmem:[%s0 + $0xd0] sm:$0xff]
  %v54 = vld [vmem:[%s0 + $0xd8] sm:$0xff]
  %v55 = vld [vmem:[%s0 + $0xe0] sm:$0xff]
  %v56 = vld [vmem:[%s0 + $0xe8] sm:$0xff]
  %v57 = vld [vmem:[%s0 + $0xf0] sm:$0xff]
  %v58 = vld [vmem:[%s0 + $0xf8] sm:$0xff]
  %v59 = vld [vmem:[%s0 + $0x100] sm:$0xff]
  %v60 = vld [vmem:[%s0 + $0x108] sm:$0xff]
  %v61 = vld [vmem:[%s0 + $0x110] sm:$0xff]
  %v62 = vld [vmem:[%s0 + $0x118] sm:$0xff]
  %v63 = vld [vmem:[%s0 + $0x120] sm:$0xff]
  %v64 = vld [vmem:[%s0 + $0x128] sm:$0xff]
  %v65 = vld [vmem:[%s0 + $0x130] sm:$0xff]
  %v66 = vld [vmem:[%s0 + $0x138] sm:$0xff]
  %v67 = vld [vmem:[%s0 + $0x140] sm:$0xff]
  %v68 = vld [vmem:[%s0 + $0x148] sm:$0xff]
  %v69 = vld [vmem:[%s0 + $0x150] sm:$0xff]
  %v70 = vld [vmem:[%s0 + $0x158] sm:$0xff]
  %v71 = vld [vmem:[%s0 + $0x160] sm:$0xff]
  %v72 = vld [vmem:[%s0 + $0x168] sm:$0xff]
  %v73 = vld [vmem:[%s0 + $0x170] sm:$0xff]
  %v74 = vld [vmem:[%s0 + $0x178] sm:$0xff]
  %v75 = vld [vmem:[%s0 + $0x180] sm:$0xff]
  %v76 = vld [vmem:[%s0 + $0x188] sm:$0xff]
  %v77 = vld [vmem:[%s0 + $0x190] sm:$0xff]
  %v78 = vld [vmem:[%s0 + $0x198] sm:$0xff]
  %v79 = vld [vmem:[%s0 + $0x1a0] sm:$0xff]
  %v80 = vld [vmem:[%s0 + $0x1a8] sm:$0xff]
  %v81 = vld [vmem:[%s0 + $0x1b0] sm:$0xff]
  %v82 = vld [vmem:[%s0 + $0x1b8] sm:$0xff]
  %v83 = vld [vmem:[%s0 + $0x1c0] sm:$0xff]
  %v84 = vld [vmem:[%s0 + $0x1c8] sm:$0xff]
  %v85 = vld [vmem:[%s0 + $0x1d0] sm:$0xff]
  %v86 = vld [vmem:[%s0 + $0x1d8] sm:$0xff]
  %v87 = vld [vmem:[%s0 + $0x1e0] sm:$0xff]
  %v88 = vld [vmem:[%s0 + $0x1e8] sm:$0xff]
  %v89 = vld [vmem:[%s0 + $0x1f0] sm:$0xff]
  %v90 = vld [vmem:[%s0 + $0x1f8] sm:$0xff]
  %v91 = vld [vmem:[%s0 + $0x200] sm:$0xff]
  %v92 = vld [vmem:[%s0 + $0x208] sm:$0xff]
  %v93 = vld [vmem:[%s0 + $0x210] sm:$0xff]
  %v94 = vld [vmem:[%s0 + $0x218] sm:$0xff]
  %v95 = vld [vmem:[%s0 + $0x220] sm:$0xff]
  %v96 = vld [vmem:[%s0 + $0x228] sm:$0xff]
  %v97 = vld [vmem:[%s0 + $0x230] sm:$0xff]
  %v98 = vld [vmem:[%s0 + $0x238] sm:$0xff]
  %v99 = vld [vmem:[%s0 + $0x240] sm:$0xff]
  %v100 = vld [vmem:[%s0 + $0x248] sm:$0xff]
  %v101 = vld [vmem:[%s0 + $0x250] sm:$0xff]
  %v102 = vld [vmem:[%s0 + $0x258] sm:$0xff]
  %v103 = vld [vmem:[%s0 + $0x260] sm:$0xff]
  %v104 = vld [vmem:[%s0 + $0x268] sm:$0xff]
  %v105 = vld [vmem:[%s0 + $0x270] sm:$0xff]
  %v106 = vld [vmem:[%s0 + $0x278] sm:$0xff]
  %v107 = vld [vmem:[%s0 + $0x280] sm:$0xff]
  %v108 = vld [vmem:[%s0 + $0x288] sm:$0xff]
  %v109 = vld [vmem:[%s0 + $0x290] sm:$0xff]
  %v110 = vld [vmem:[%s0 + $0x298] sm:$0xff]
  %v111 = vld [vmem:[%s0 + $0x2a0] sm:$0xff]
  %v112 = vld [vmem:[%s0 + $0x2a8] sm:$0xff]
  %v113 = vld [vmem:[%s0 + $0x2b0] sm:$0xff]
  %v114 = vld [vmem:[%s0 + $0x2b8] sm:$0xff]
  %v115 = vld [vmem:[%s0 + $0x2c0] sm:$0xff]
  %v116 = vld [vmem:[%s0 + $0x2c8] sm:$0xff]
  %v117 = vld [vmem:[%s0 + $0x2d0] sm:$0xff]
  %v118 = vld [vmem:[%s0 + $0x2d8] sm:$0xff]
  %v119 = vld [vmem:[%s0 + $0x2e0] sm:$0xff]
  %v120 = vld [vmem:[%s0 + $0x2e8] sm:$0xff]
  %v121 = vld [vmem:[%s0 + $0x2f0] sm:$0xff]
  %v122 = vld [vmem:[%s0 + $0x2f8] sm:$0xff]
  %v123 = vld [vmem:[%s0 + $0x300] sm:$0xff]
  %v124 = vld [vmem:[%s0 + $0x308] sm:$0xff]
  %v125 = vld [vmem:[%s0 + $0x310] sm:$0xff]
  %v126 = vld [vmem:[%s0 + $0x318] sm:$0xff]
  %v127 = vld [vmem:[%s0 + $0x320] sm:$0xff]
  %v128 = vld [vmem:[%s0 + $0x328] sm:$0xff]
  %v129 = vld [vmem:[%s0 + $0x330] sm:$0xff]
  %v130 = vld [vmem:[%s0 + $0x338] sm:$0xff]
  %v131 = vld [vmem:[%s0 + $0x340] sm:$0xff]
  %v132 = vld [vmem:[%s0 + $0x348] sm:$0xff]
  %v133 = vld [vmem:[%s0 + $0x350] sm:$0xff]
  %v134 = vld [vmem:[%s0 + $0x358] sm:$0xff]
  %v135 = vld [vmem:[%s0 + $0x360] sm:$0xff]
  %v136 = vld [vmem:[%s0 + $0x368] sm:$0xff]
  %v137 = vld [vmem:[%s0 + $0x370] sm:$0xff]
  %v138 = vld [vmem:[%s0 + $0x378] sm:$0xff]
  %v139 = vld [vmem:[%s0 + $0x380] sm:$0xff]
  %v140 = vld [vmem:[%s0 + $0x388] sm:$0xff]
  %v141 = vld [vmem:[%s0 + $0x390] sm:$0xff]
  %v142 = vld [vmem:[%s0 + $0x398] sm:$0xff]
  %v143 = vld [vmem:[%s0 + $0x3a0] sm:$0xff]
  %v144 = vld [vmem:[%s0 + $0x3a8] sm:$0xff]
  %v145 = vld [vmem:[%s0 + $0x3b0] sm:$0xff]
  %v146 = vld [vmem:[%s0 + $0x3b8] sm:$0xff]
  %v147 = vld [vmem:[%s0 + $0x3c0] sm:$0xff]
  %v148 = vld [vmem:[%s0 + $0x3c8] sm:$0xff]
  %v149 = vld [vmem:[%s0 + $0x3d0] sm:$0xff]
  %v150 = vld [vmem:[%s0 + $0x3d8] sm:$0xff]
  %v151 = vld [vmem:[%s0 + $0x3e0] sm:$0xff]
  %v152 = vld [vmem:[%s0 + $0x3e8] sm:$0xff]
  %v153 = vld [vmem:[%s0 + $0x3f0] sm:$0xff]
  %v154 = vld [vmem:[%s0 + $0x3f8] sm:$0xff]
  %v155 = vld [vmem:[%s0 + $0x400] sm:$0xff]
  %v156 = vld [vmem:[%s0 + $0x408] sm:$0xff]
  %v157 = vld [vmem:[%s0 + $0x410] sm:$0xff]
  %v158 = vld [vmem:[%s0 + $0x418] sm:$0xff]
  %v159 = vld [vmem:[%s0 + $0x420] sm:$0xff]
  %v160 = vld [vmem:[%s0 + $0x428] sm:$0xff]
  %v161 = vld [vmem:[%s0 + $0x430] sm:$0xff]
  %v162 = vld [vmem:[%s0 + $0x438] sm:$0xff]
  %v163 = vld [vmem:[%s0 + $0x440] sm:$0xff]
  %v164 = vld [vmem:[%s0 + $0x448] sm:$0xff]
  %v165 = vld [vmem:[%s0 + $0x450] sm:$0xff]
  %v166 = vld [vmem:[%s0 + $0x458] sm:$0xff]
  %v167 = vld [vmem:[%s0 + $0x460] sm:$0xff]
  %v168 = vld [vmem:[%s0 + $0x468] sm:$0xff]
  %v169 = vld [vmem:[%s0 + $0x470] sm:$0xff]
  %v170 = vld [vmem:[%s0 + $0x478] sm:$0xff]
  %v171 = vld [vmem:[%s0 + $0x480] sm:$0xff]
  %v172 = vld [vmem:[%s0 + $0x488] sm:$0xff]
  %v173 = vld [vmem:[%s0 + $0x490] sm:$0xff]
  %v174 = vld [vmem:[%s0 + $0x498] sm:$0xff]
  %v175 = vld [vmem:[%s0 + $0x4a0] sm:$0xff]
  %v176 = vld [vmem:[%s0 + $0x4a8] sm:$0xff]
  %v177 = vld [vmem:[%s0 + $0x4b0] sm:$0xff]
  %v178 = vld [vmem:[%s0 + $0x4b8] sm:$0xff]
  %v179 = vld [vmem:[%s0 + $0x4c0] sm:$0xff]
  %v180 = vld [vmem:[%s0 + $0x4c8] sm:$0xff]
  %v181 = vld [vmem:[%s0 + $0x4d0] sm:$0xff]
  %v182 = vld [vmem:[%s0 + $0x4d8] sm:$0xff]
  %v183 = vld [vmem:[%s0 + $0x4e0] sm:$0xff]
  %v184 = vld [vmem:[%s0 + $0x4e8] sm:$0xff]
  %v185 = vld [vmem:[%s0 + $0x4f0] sm:$0xff]
  %v186 = vld [vmem:[%s0 + $0x4f8] sm:$0xff]
  %v187 = vld [vmem:[%s0 + $0x500] sm:$0xff]
  %v188 = vld [vmem:[%s0 + $0x508] sm:$0xff]
  %v189 = vld [vmem:[%s0 + $0x510] sm:$0xff]
  %v190 = vld [vmem:[%s0 + $0x518] sm:$0xff]
  %v191 = vld [vmem:[%s0 + $0x520] sm:$0xff]
  %v192 = vld [vmem:[%s0 + $0x528] sm:$0xff]
  %v193 = vld [vmem:[%s0 + $0x530] sm:$0xff]
  %v194 = vld [vmem:[%s0 + $0x538] sm:$0xff]
  %v195 = vld [vmem:[%s0 + $0x540] sm:$0xff]
  %v196 = vld [vmem:[%s0 + $0x548] sm:$0xff]
  %v197 = vld [vmem:[%s0 + $0x550] sm:$0xff]
  %v198 = vld [vmem:[%s0 + $0x558] sm:$0xff]
  %v199 = vld [vmem:[%s0 + $0x560] sm:$0xff]
  %v200 = vld [vmem:[%s0 + $0x568] sm:$0xff]
  %v201 = vld [vmem:[%s0 + $0x570] sm:$0xff]
  %v202 = vld [vmem:[%s0 + $0x578] sm:$0xff]
  %v203 = vld [vmem:[%s0 + $0x580] sm:$0xff]
  %v204 = vld [vmem:[%s0 + $0x588] sm:$0xff]
  %v205 = vld [vmem:[%s0 + $0x590] sm:$0xff]
  %v206 = vld [vmem:[%s0 + $0x598] sm:$0xff]
  %v207 = vld [vmem:[%s0 + $0x5a0] sm:$0xff]
  %v208 = vld [vmem:[%s0 + $0x5a8] sm:$0xff]
  %v209 = vld [vmem:[%s0 + $0x5b0] sm:$0xff]
  %v210 = vld [vmem:[%s0 + $0x5b8] sm:$0xff]
  %v211 = vld [vmem:[%s0 + $0x5c0] sm:$0xff]
  %v212 = vld [vmem:[%s0 + $0x5c8] sm:$0xff]
  %v213 = vld [vmem:[%s0 + $0x5d0] sm:$0xff]
  %v214 = vld [vmem:[%s0 + $0x5d8] sm:$0xff]
  %v215 = vld [vmem:[%s0 + $0x5e0] sm:$0xff]
  %v216 = vld [vmem:[%s0 + $0x5e8] sm:$0xff]
  %v217 = vld [vmem:[%s0 + $0x5f0] sm:$0xff]
  %v218 = vld [vmem:[%s0 + $0x5f8] sm:$0xff]
  %v219 = vld [vmem:[%s0 + $0x600] sm:$0xff]
  %v220 = vld [vmem:[%s0 + $0x608] sm:$0xff]
  %v221 = vld [vmem:[%s0 + $0x610] sm:$0xff]
  %v222 = vld [vmem:[%s0 + $0x618] sm:$0xff]
  %v223 = vld [vmem:[%s0 + $0x620] sm:$0xff]
  %v224 = vld [vmem:[%s0 + $0x628] sm:$0xff]
  %v225 = vld [vmem:[%s0 + $0x630] sm:$0xff]
  %v226 = vld [vmem:[%s0 + $0x638] sm:$0xff]
  %v227 = vld [vmem:[%s0 + $0x640] sm:$0xff]
  %v228 = vld [vmem:[%s0 + $0x648] sm:$0xff]
  %v229 = vld [vmem:[%s0 + $0x650] sm:$0xff]
  %v230 = vld [vmem:[%s0 + $0x658] sm:$0xff]
  %v231 = vld [vmem:[%s0 + $0x660] sm:$0xff]
  %v232 = vld [vmem:[%s0 + $0x668] sm:$0xff]
  %v233 = vld [vmem:[%s0 + $0x670] sm:$0xff]
  %v234 = vld [vmem:[%s0 + $0x678] sm:$0xff]
  %v235 = vld [vmem:[%s0 + $0x680] sm:$0xff]
  %v236 = vld [vmem:[%s0 + $0x688] sm:$0xff]
  %v237 = vld [vmem:[%s0 + $0x690] sm:$0xff]
  %v238 = vld [vmem:[%s0 + $0x698] sm:$0xff]
  %v239 = vld [vmem:[%s0 + $0x6a0] sm:$0xff]
  %v240 = vld [vmem:[%s0 + $0x6a8] sm:$0xff]
  %v241 = vld [vmem:[%s0 + $0x6b0] sm:$0xff]
  %v242 = vld [vmem:[%s0 + $0x6b8] sm:$0xff]
  %v243 = vld [vmem:[%s0 + $0x6c0] sm:$0xff]
  %v244 = vld [vmem:[%s0 + $0x6c8] sm:$0xff]
  %v245 = vld [vmem:[%s0 + $0x6d0] sm:$0xff]
  %v246 = vld [vmem:[%s0 + $0x6d8] sm:$0xff]
  %v247 = vld [vmem:[%s0 + $0x6e0] sm:$0xff]
  %v248 = vld [vmem:[%s0 + $0x6e8] sm:$0xff]
  %v249 = vld [vmem:[%s0 + $0x6f0] sm:$0xff]
  %v250 = vld [vmem:[%s0 + $0x6f8] sm:$0xff]
  %v251 = vpack.c.bf16 %v34, %v27
  %v252 = vpack.c.bf16 %v35, %v28
  %v253 = vpack.c.bf16 %v36, %v29
  %v254 = vpack.c.bf16 %v37, %v30
  %v255 = vpack.c.bf16 %v38, %v31
  %v256 = vpack.c.bf16 %v39, %v32
  %v257 = vpack.c.bf16 %v40, %v33
  %v258 = vpack.c.bf16 %v48, %v41
  %v259 = vpack.c.bf16 %v49, %v42
  %v260 = vpack.c.bf16 %v50, %v43
  %v261 = vpack.c.bf16 %v51, %v44
  %v262 = vpack.c.bf16 %v52, %v45
  %v263 = vpack.c.bf16 %v53, %v46
  %v264 = vpack.c.bf16 %v54, %v47
  %v265 = vpack.c.bf16 %v62, %v55
  %v266 = vpack.c.bf16 %v63, %v56
  %v267 = vpack.c.bf16 %v64, %v57
  %v268 = vpack.c.bf16 %v65, %v58
  %v269 = vpack.c.bf16 %v66, %v59
  %v270 = vpack.c.bf16 %v67, %v60
  %v271 = vpack.c.bf16 %v68, %v61
  %v272 = vpack.c.bf16 %v76, %v69
  %v273 = vpack.c.bf16 %v77, %v70
  %v274 = vpack.c.bf16 %v78, %v71
  %v275 = vpack.c.bf16 %v79, %v72
  %v276 = vpack.c.bf16 %v80, %v73
  %v277 = vpack.c.bf16 %v81, %v74
  %v278 = vpack.c.bf16 %v82, %v75
  %v279 = vpack.c.bf16 %v90, %v83
  %v280 = vpack.c.bf16 %v91, %v84
  %v281 = vpack.c.bf16 %v92, %v85
  %v282 = vpack.c.bf16 %v93, %v86
  %v283 = vpack.c.bf16 %v94, %v87
  %v284 = vpack.c.bf16 %v95, %v88
  %v285 = vpack.c.bf16 %v96, %v89
  %v286 = vpack.c.bf16 %v104, %v97
  %v287 = vpack.c.bf16 %v105, %v98
  %v288 = vpack.c.bf16 %v106, %v99
  %v289 = vpack.c.bf16 %v107, %v100
  %v290 = vpack.c.bf16 %v108, %v101
  %v291 = vpack.c.bf16 %v109, %v102
  %v292 = vpack.c.bf16 %v110, %v103
  %v293 = vpack.c.bf16 %v118, %v111
  %v294 = vpack.c.bf16 %v119, %v112
  %v295 = vpack.c.bf16 %v120, %v113
  %v296 = vpack.c.bf16 %v121, %v114
  %v297 = vpack.c.bf16 %v122, %v115
  %v298 = vpack.c.bf16 %v123, %v116
  %v299 = vpack.c.bf16 %v124, %v117
  %v300 = vpack.c.bf16 %v132, %v125
  %v301 = vpack.c.bf16 %v133, %v126
  %v302 = vpack.c.bf16 %v134, %v127
  %v303 = vpack.c.bf16 %v135, %v128
  %v304 = vpack.c.bf16 %v136, %v129
  %v305 = vpack.c.bf16 %v137, %v130
  %v306 = vpack.c.bf16 %v138, %v131
  %v307 = vpack.c.bf16 %v146, %v139
  %v308 = vpack.c.bf16 %v147, %v140
  %v309 = vpack.c.bf16 %v148, %v141
  %v310 = vpack.c.bf16 %v149, %v142
  %v311 = vpack.c.bf16 %v150, %v143
  %v312 = vpack.c.bf16 %v151, %v144
  %v313 = vpack.c.bf16 %v152, %v145
  %v314 = vpack.c.bf16 %v160, %v153
  %v315 = vpack.c.bf16 %v161, %v154
  %v316 = vpack.c.bf16 %v162, %v155
  %v317 = vpack.c.bf16 %v163, %v156
  %v318 = vpack.c.bf16 %v164, %v157
  %v319 = vpack.c.bf16 %v165, %v158
  %v320 = vpack.c.bf16 %v166, %v159
  %v321 = vpack.c.bf16 %v174, %v167
  %v322 = vpack.c.bf16 %v175, %v168
  %v323 = vpack.c.bf16 %v176, %v169
  %v324 = vpack.c.bf16 %v177, %v170
  %v325 = vpack.c.bf16 %v178, %v171
  %v326 = vpack.c.bf16 %v179, %v172
  %v327 = vpack.c.bf16 %v180, %v173
  %v328 = vpack.c.bf16 %v188, %v181
  %v329 = vpack.c.bf16 %v189, %v182
  %v330 = vpack.c.bf16 %v190, %v183
  %v331 = vpack.c.bf16 %v191, %v184
  %v332 = vpack.c.bf16 %v192, %v185
  %v333 = vpack.c.bf16 %v193, %v186
  %v334 = vpack.c.bf16 %v194, %v187
  %v335 = vpack.c.bf16 %v202, %v195
  %v336 = vpack.c.bf16 %v203, %v196
  %v337 = vpack.c.bf16 %v204, %v197
  %v338 = vpack.c.bf16 %v205, %v198
  %v339 = vpack.c.bf16 %v206, %v199
  %v340 = vpack.c.bf16 %v207, %v200
  %v341 = vpack.c.bf16 %v208, %v201
  %v342 = vpack.c.bf16 %v216, %v209
  %v343 = vpack.c.bf16 %v217, %v210
  %v344 = vpack.c.bf16 %v218, %v211
  %v345 = vpack.c.bf16 %v219, %v212
  %v346 = vpack.c.bf16 %v220, %v213
  %v347 = vpack.c.bf16 %v221, %v214
  %v348 = vpack.c.bf16 %v222, %v215
  %v349 = vpack.c.bf16 %v230, %v223
  %v350 = vpack.c.bf16 %v231, %v224
  %v351 = vpack.c.bf16 %v232, %v225
  %v352 = vpack.c.bf16 %v233, %v226
  %v353 = vpack.c.bf16 %v234, %v227
  %v354 = vpack.c.bf16 %v235, %v228
  %v355 = vpack.c.bf16 %v236, %v229
  %v356 = vpack.c.bf16 %v244, %v237
  %v357 = vpack.c.bf16 %v245, %v238
  %v358 = vpack.c.bf16 %v246, %v239
  %v359 = vpack.c.bf16 %v247, %v240
  %v360 = vpack.c.bf16 %v248, %v241
  %v361 = vpack.c.bf16 %v249, %v242
  %v362 = vpack.c.bf16 %v250, %v243
  %v363 = vld [vmem:[%s1] sm:$0xf]
  %v364 = vld [vmem:[%s1 + $0x4] sm:$0xf]
  %v365 = vld [vmem:[%s1 + $0x8] sm:$0xf]
  %v366 = vld [vmem:[%s1 + $0xc] sm:$0xf]
  %v367 = vld [vmem:[%s1 + $0x10] sm:$0xf]
  %v368 = vld [vmem:[%s1 + $0x14] sm:$0xf]
  %v369 = vld [vmem:[%s1 + $0x18] sm:$0xf]
  %v370 = vld [vmem:[%s1 + $0x1c] sm:$0xf]
  %v371 = vld [vmem:[%s1 + $0x20] sm:$0xf]
  %v372 = vld [vmem:[%s1 + $0x24] sm:$0xf]
  %v373 = vld [vmem:[%s1 + $0x28] sm:$0xf]
  %v374 = vld [vmem:[%s1 + $0x2c] sm:$0xf]
  %v375 = vld [vmem:[%s1 + $0x30] sm:$0xf]
  %v376 = vld [vmem:[%s1 + $0x34] sm:$0xf]
  %v377 = vld [vmem:[%s1 + $0x38] sm:$0xf]
  %v378 = vld [vmem:[%s1 + $0x3c] sm:$0xf]
  %v379 = vld [vmem:[%s1 + $0x40] sm:$0xf]
  %v380 = vld [vmem:[%s1 + $0x44] sm:$0xf]
  %v381 = vld [vmem:[%s1 + $0x48] sm:$0xf]
  %v382 = vld [vmem:[%s1 + $0x4c] sm:$0xf]
  %v383 = vld [vmem:[%s1 + $0x50] sm:$0xf]
  %v384 = vld [vmem:[%s1 + $0x54] sm:$0xf]
  %v385 = vld [vmem:[%s1 + $0x58] sm:$0xf]
  %v386 = vld [vmem:[%s1 + $0x5c] sm:$0xf]
  %v387 = vld [vmem:[%s1 + $0x60] sm:$0xf]
  %v388 = vld [vmem:[%s1 + $0x64] sm:$0xf]
  %v389 = vld [vmem:[%s1 + $0x68] sm:$0xf]
  %v390 = vld [vmem:[%s1 + $0x6c] sm:$0xf]
  %v391 = vld [vmem:[%s1 + $0x70] sm:$0xf]
  %v392 = vld [vmem:[%s1 + $0x74] sm:$0xf]
  %v393 = vld [vmem:[%s1 + $0x78] sm:$0xf]
  %v394 = vld [vmem:[%s1 + $0x7c] sm:$0xf]
  %v395 = vld [vmem:[%s1 + $0x80] sm:$0xf]
  %v396 = vld [vmem:[%s1 + $0x84] sm:$0xf]
  %v397 = vld [vmem:[%s1 + $0x88] sm:$0xf]
  %v398 = vld [vmem:[%s1 + $0x8c] sm:$0xf]
  %v399 = vld [vmem:[%s1 + $0x90] sm:$0xf]
  %v400 = vld [vmem:[%s1 + $0x94] sm:$0xf]
  %v401 = vld [vmem:[%s1 + $0x98] sm:$0xf]
  %v402 = vld [vmem:[%s1 + $0x9c] sm:$0xf]
  %v403 = vld [vmem:[%s1 + $0xa0] sm:$0xf]
  %v404 = vld [vmem:[%s1 + $0xa4] sm:$0xf]
  %v405 = vld [vmem:[%s1 + $0xa8] sm:$0xf]
  %v406 = vld [vmem:[%s1 + $0xac] sm:$0xf]
  %v407 = vld [vmem:[%s1 + $0xb0] sm:$0xf]
  %v408 = vld [vmem:[%s1 + $0xb4] sm:$0xf]
  %v409 = vld [vmem:[%s1 + $0xb8] sm:$0xf]
  %v410 = vld [vmem:[%s1 + $0xbc] sm:$0xf]
  %v411 = vld [vmem:[%s1 + $0xc0] sm:$0xf]
  %v412 = vld [vmem:[%s1 + $0xc4] sm:$0xf]
  %v413 = vld [vmem:[%s1 + $0xc8] sm:$0xf]
  %v414 = vld [vmem:[%s1 + $0xcc] sm:$0xf]
  %v415 = vld [vmem:[%s1 + $0xd0] sm:$0xf]
  %v416 = vld [vmem:[%s1 + $0xd4] sm:$0xf]
  %v417 = vld [vmem:[%s1 + $0xd8] sm:$0xf]
  %v418 = vld [vmem:[%s1 + $0xdc] sm:$0xf]
  %v419 = vld [vmem:[%s1 + $0xe0] sm:$0xf]
  %v420 = vld [vmem:[%s1 + $0xe4] sm:$0xf]
  %v421 = vld [vmem:[%s1 + $0xe8] sm:$0xf]
  %v422 = vld [vmem:[%s1 + $0xec] sm:$0xf]
  %v423 = vld [vmem:[%s1 + $0xf0] sm:$0xf]
  %v424 = vld [vmem:[%s1 + $0xf4] sm:$0xf]
  %v425 = vld [vmem:[%s1 + $0xf8] sm:$0xf]
  %v426 = vld [vmem:[%s1 + $0xfc] sm:$0xf]
  %v427 = vld [vmem:[%s1 + $0x100] sm:$0xf]
  %v428 = vld [vmem:[%s1 + $0x104] sm:$0xf]
  %v429 = vld [vmem:[%s1 + $0x108] sm:$0xf]
  %v430 = vld [vmem:[%s1 + $0x10c] sm:$0xf]
  %v431 = vld [vmem:[%s1 + $0x110] sm:$0xf]
  %v432 = vld [vmem:[%s1 + $0x114] sm:$0xf]
  %v433 = vld [vmem:[%s1 + $0x118] sm:$0xf]
  %v434 = vld [vmem:[%s1 + $0x11c] sm:$0xf]
  %v435 = vld [vmem:[%s1 + $0x120] sm:$0xf]
  %v436 = vld [vmem:[%s1 + $0x124] sm:$0xf]
  %v437 = vld [vmem:[%s1 + $0x128] sm:$0xf]
  %v438 = vld [vmem:[%s1 + $0x12c] sm:$0xf]
  %v439 = vld [vmem:[%s1 + $0x130] sm:$0xf]
  %v440 = vld [vmem:[%s1 + $0x134] sm:$0xf]
  %v441 = vld [vmem:[%s1 + $0x138] sm:$0xf]
  %v442 = vld [vmem:[%s1 + $0x13c] sm:$0xf]
  %v443 = vld [vmem:[%s1 + $0x140] sm:$0xf]
  %v444 = vld [vmem:[%s1 + $0x144] sm:$0xf]
  %v445 = vld [vmem:[%s1 + $0x148] sm:$0xf]
  %v446 = vld [vmem:[%s1 + $0x14c] sm:$0xf]
  %v447 = vld [vmem:[%s1 + $0x150] sm:$0xf]
  %v448 = vld [vmem:[%s1 + $0x154] sm:$0xf]
  %v449 = vld [vmem:[%s1 + $0x158] sm:$0xf]
  %v450 = vld [vmem:[%s1 + $0x15c] sm:$0xf]
  %v451 = vld [vmem:[%s1 + $0x160] sm:$0xf]
  %v452 = vld [vmem:[%s1 + $0x164] sm:$0xf]
  %v453 = vld [vmem:[%s1 + $0x168] sm:$0xf]
  %v454 = vld [vmem:[%s1 + $0x16c] sm:$0xf]
  %v455 = vld [vmem:[%s1 + $0x170] sm:$0xf]
  %v456 = vld [vmem:[%s1 + $0x174] sm:$0xf]
  %v457 = vld [vmem:[%s1 + $0x178] sm:$0xf]
  %v458 = vld [vmem:[%s1 + $0x17c] sm:$0xf]
  %v459 = vld [vmem:[%s1 + $0x180] sm:$0xf]
  %v460 = vld [vmem:[%s1 + $0x184] sm:$0xf]
  %v461 = vld [vmem:[%s2] sm:$0x1]
  %v463 = vperm.slane %v461, 0
  %v563 = vunpack.c.l.b16 %v363
  %v564 = vunpack.c.l.b16 %v364
  %v565 = vunpack.c.l.b16 %v365
  %v566 = vunpack.c.l.b16 %v366
  %v567 = vunpack.c.l.b16 %v367
  %v568 = vunpack.c.l.b16 %v368
  %v569 = vunpack.c.l.b16 %v369
  %v570 = vunpack.c.l.b16 %v370
  %v571 = vunpack.c.l.b16 %v371
  %v572 = vunpack.c.l.b16 %v372
  %v573 = vunpack.c.l.b16 %v373
  %v574 = vunpack.c.l.b16 %v374
  %v575 = vunpack.c.l.b16 %v375
  %v576 = vunpack.c.l.b16 %v376
  %v577 = vunpack.c.l.b16 %v377
  %v578 = vunpack.c.l.b16 %v378
  %v579 = vunpack.c.l.b16 %v379
  %v580 = vunpack.c.l.b16 %v380
  %v581 = vunpack.c.l.b16 %v381
  %v582 = vunpack.c.l.b16 %v382
  %v583 = vunpack.c.l.b16 %v383
  %v584 = vunpack.c.l.b16 %v384
  %v585 = vunpack.c.l.b16 %v385
  %v586 = vunpack.c.l.b16 %v386
  %v587 = vunpack.c.l.b16 %v387
  %v588 = vunpack.c.l.b16 %v388
  %v589 = vunpack.c.l.b16 %v389
  %v590 = vunpack.c.l.b16 %v390
  %v591 = vunpack.c.l.b16 %v391
  %v592 = vunpack.c.l.b16 %v392
  %v593 = vunpack.c.l.b16 %v393
  %v594 = vunpack.c.l.b16 %v394
  %v595 = vunpack.c.l.b16 %v395
  %v596 = vunpack.c.l.b16 %v396
  %v597 = vunpack.c.l.b16 %v397
  %v598 = vunpack.c.l.b16 %v398
  %v599 = vunpack.c.l.b16 %v399
  %v600 = vunpack.c.l.b16 %v400
  %v601 = vunpack.c.l.b16 %v401
  %v602 = vunpack.c.l.b16 %v402
  %v603 = vunpack.c.l.b16 %v403
  %v604 = vunpack.c.l.b16 %v404
  %v605 = vunpack.c.l.b16 %v405
  %v606 = vunpack.c.l.b16 %v406
  %v607 = vunpack.c.l.b16 %v407
  %v608 = vunpack.c.l.b16 %v408
  %v609 = vunpack.c.l.b16 %v409
  %v610 = vunpack.c.l.b16 %v410
  %v611 = vunpack.c.l.b16 %v411
  %v612 = vunpack.c.l.b16 %v412
  %v613 = vunpack.c.l.b16 %v413
  %v614 = vunpack.c.l.b16 %v414
  %v615 = vunpack.c.l.b16 %v415
  %v616 = vunpack.c.l.b16 %v416
  %v617 = vunpack.c.l.b16 %v417
  %v618 = vunpack.c.l.b16 %v418
  %v619 = vunpack.c.l.b16 %v419
  %v620 = vunpack.c.l.b16 %v420
  %v621 = vunpack.c.l.b16 %v421
  %v622 = vunpack.c.l.b16 %v422
  %v623 = vunpack.c.l.b16 %v423
  %v624 = vunpack.c.l.b16 %v424
  %v625 = vunpack.c.l.b16 %v425
  %v626 = vunpack.c.l.b16 %v426
  %v627 = vunpack.c.l.b16 %v427
  %v628 = vunpack.c.l.b16 %v428
  %v629 = vunpack.c.l.b16 %v429
  %v630 = vunpack.c.l.b16 %v430
  %v631 = vunpack.c.l.b16 %v431
  %v632 = vunpack.c.l.b16 %v432
  %v633 = vunpack.c.l.b16 %v433
  %v634 = vunpack.c.l.b16 %v434
  %v635 = vunpack.c.l.b16 %v435
  %v636 = vunpack.c.l.b16 %v436
  %v637 = vunpack.c.l.b16 %v437
  %v638 = vunpack.c.l.b16 %v438
  %v639 = vunpack.c.l.b16 %v439
  %v640 = vunpack.c.l.b16 %v440
  %v641 = vunpack.c.l.b16 %v441
  %v642 = vunpack.c.l.b16 %v442
  %v643 = vunpack.c.l.b16 %v443
  %v644 = vunpack.c.l.b16 %v444
  %v645 = vunpack.c.l.b16 %v445
  %v646 = vunpack.c.l.b16 %v446
  %v647 = vunpack.c.l.b16 %v447
  %v648 = vunpack.c.l.b16 %v448
  %v649 = vunpack.c.l.b16 %v449
  %v650 = vunpack.c.l.b16 %v450
  %v651 = vunpack.c.l.b16 %v451
  %v652 = vunpack.c.l.b16 %v452
  %v653 = vunpack.c.l.b16 %v453
  %v654 = vunpack.c.l.b16 %v454
  %v655 = vunpack.c.l.b16 %v455
  %v656 = vunpack.c.l.b16 %v456
  %v657 = vunpack.c.l.b16 %v457
  %v658 = vunpack.c.l.b16 %v458
  %v659 = vunpack.c.l.b16 %v459
  %v660 = vunpack.c.l.b16 %v460
  %v661 = vpack.c.b16 %v564, %v563
  %v662 = vpack.c.b16 %v566, %v565
  %v663 = vpack.c.b16 %v568, %v567
  %v664 = vpack.c.b16 %v570, %v569
  %v665 = vpack.c.b16 %v572, %v571
  %v666 = vpack.c.b16 %v574, %v573
  %v667 = vpack.c.b16 %v576, %v575
  %v668 = vpack.c.b16 %v578, %v577
  %v669 = vpack.c.b16 %v580, %v579
  %v670 = vpack.c.b16 %v582, %v581
  %v671 = vpack.c.b16 %v584, %v583
  %v672 = vpack.c.b16 %v586, %v585
  %v673 = vpack.c.b16 %v588, %v587
  %v674 = vpack.c.b16 %v590, %v589
  %v675 = vpack.c.b16 %v592, %v591
  %v676 = vpack.c.b16 %v594, %v593
  %v677 = vpack.c.b16 %v596, %v595
  %v678 = vpack.c.b16 %v598, %v597
  %v679 = vpack.c.b16 %v600, %v599
  %v680 = vpack.c.b16 %v602, %v601
  %v681 = vpack.c.b16 %v604, %v603
  %v682 = vpack.c.b16 %v606, %v605
  %v683 = vpack.c.b16 %v608, %v607
  %v684 = vpack.c.b16 %v610, %v609
  %v685 = vpack.c.b16 %v612, %v611
  %v686 = vpack.c.b16 %v614, %v613
  %v687 = vpack.c.b16 %v616, %v615
  %v688 = vpack.c.b16 %v618, %v617
  %v689 = vpack.c.b16 %v620, %v619
  %v690 = vpack.c.b16 %v622, %v621
  %v691 = vpack.c.b16 %v624, %v623
  %v692 = vpack.c.b16 %v626, %v625
  %v693 = vpack.c.b16 %v628, %v627
  %v694 = vpack.c.b16 %v630, %v629
  %v695 = vpack.c.b16 %v632, %v631
  %v696 = vpack.c.b16 %v634, %v633
  %v697 = vpack.c.b16 %v636, %v635
  %v698 = vpack.c.b16 %v638, %v637
  %v699 = vpack.c.b16 %v640, %v639
  %v700 = vpack.c.b16 %v642, %v641
  %v701 = vpack.c.b16 %v644, %v643
  %v702 = vpack.c.b16 %v646, %v645
  %v703 = vpack.c.b16 %v648, %v647
  %v704 = vpack.c.b16 %v650, %v649
  %v705 = vpack.c.b16 %v652, %v651
  %v706 = vpack.c.b16 %v654, %v653
  %v707 = vpack.c.b16 %v656, %v655
  %v708 = vpack.c.b16 %v658, %v657
  %v709 = vpack.c.b16 %v660, %v659
  %vm759 = vcmask 130048
  %v761 = vsel %vm759, %v257, 0
  %v764 = vsel %vm759, %v264, 0
  %v767 = vsel %vm759, %v271, 0
  %v770 = vsel %vm759, %v278, 0
  %v773 = vsel %vm759, %v285, 0
  %v776 = vsel %vm759, %v292, 0
  %v779 = vsel %vm759, %v299, 0
  %v782 = vsel %vm759, %v306, 0
  %v785 = vsel %vm759, %v313, 0
  %v788 = vsel %vm759, %v320, 0
  %v791 = vsel %vm759, %v327, 0
  %v794 = vsel %vm759, %v334, 0
  %v797 = vsel %vm759, %v341, 0
  %v800 = vsel %vm759, %v348, 0
  %v803 = vsel %vm759, %v355, 0
  %v806 = vsel %vm759, %v362, 0
  %808 = vmatpush.bf16.msra.mxu0 %v668
  %809 = vmatpush.bf16.msra.mxu0 %v667
  %810 = vmatpush.bf16.msra.mxu0 %v666
  %811 = vmatpush.bf16.msra.mxu0 %v665
  %812 = vmatpush.bf16.msra.mxu0 %v664
  %813 = vmatpush.bf16.msra.mxu0 %v663
  %814 = vmatpush.bf16.msra.mxu0 %v662
  %815 = vmatpush.bf16.msra.mxu0 %v661
  %816 = vmatmul.bf16.gmra.mxu0 %v251
  %v817 = vpop.f32.mrf.mxu0
  %v818 = vadd.f32 %v463, %v817
  %v819 = vpop.f32.mrf.mxu0
  %v820 = vadd.f32 %v463, %v819
  %821 = vmatmul.bf16.gmra.mxu0 %v258
  %v822 = vpop.f32.mrf.mxu0
  %v823 = vadd.f32 %v463, %v822
  %v824 = vpop.f32.mrf.mxu0
  %v825 = vadd.f32 %v463, %v824
  %826 = vmatmul.bf16.gmra.mxu0 %v265
  %v827 = vpop.f32.mrf.mxu0
  %v828 = vadd.f32 %v463, %v827
  %v829 = vpop.f32.mrf.mxu0
  %v830 = vadd.f32 %v463, %v829
  %831 = vmatmul.bf16.gmra.mxu0 %v272
  %v832 = vpop.f32.mrf.mxu0
  %v833 = vadd.f32 %v463, %v832
  %v834 = vpop.f32.mrf.mxu0
  %v835 = vadd.f32 %v463, %v834
  %836 = vmatmul.bf16.gmra.mxu0 %v279
  %v837 = vpop.f32.mrf.mxu0
  %v838 = vadd.f32 %v463, %v837
  %v839 = vpop.f32.mrf.mxu0
  %v840 = vadd.f32 %v463, %v839
  %841 = vmatmul.bf16.gmra.mxu0 %v286
  %v842 = vpop.f32.mrf.mxu0
  %v843 = vadd.f32 %v463, %v842
  %v844 = vpop.f32.mrf.mxu0
  %v845 = vadd.f32 %v463, %v844
  %846 = vmatmul.bf16.gmra.mxu0 %v293
  %v847 = vpop.f32.mrf.mxu0
  %v848 = vadd.f32 %v463, %v847
  %v849 = vpop.f32.mrf.mxu0
  %v850 = vadd.f32 %v463, %v849
  %851 = vmatmul.bf16.gmra.mxu0 %v300
  %v852 = vpop.f32.mrf.mxu0
  %v853 = vadd.f32 %v463, %v852
  %v854 = vpop.f32.mrf.mxu0
  %v855 = vadd.f32 %v463, %v854
  %856 = vmatmul.bf16.gmra.mxu0 %v307
  %v857 = vpop.f32.mrf.mxu0
  %v858 = vadd.f32 %v463, %v857
  %v859 = vpop.f32.mrf.mxu0
  %v860 = vadd.f32 %v463, %v859
  %861 = vmatmul.bf16.gmra.mxu0 %v314
  %v862 = vpop.f32.mrf.mxu0
  %v863 = vadd.f32 %v463, %v862
  %v864 = vpop.f32.mrf.mxu0
  %v865 = vadd.f32 %v463, %v864
  %866 = vmatmul.bf16.gmra.mxu0 %v321
  %v867 = vpop.f32.mrf.mxu0
  %v868 = vadd.f32 %v463, %v867
  %v869 = vpop.f32.mrf.mxu0
  %v870 = vadd.f32 %v463, %v869
  %871 = vmatmul.bf16.gmra.mxu0 %v328
  %v872 = vpop.f32.mrf.mxu0
  %v873 = vadd.f32 %v463, %v872
  %v874 = vpop.f32.mrf.mxu0
  %v875 = vadd.f32 %v463, %v874
  %876 = vmatmul.bf16.gmra.mxu0 %v335
  %v877 = vpop.f32.mrf.mxu0
  %v878 = vadd.f32 %v463, %v877
  %v879 = vpop.f32.mrf.mxu0
  %v880 = vadd.f32 %v463, %v879
  %881 = vmatmul.bf16.gmra.mxu0 %v342
  %v882 = vpop.f32.mrf.mxu0
  %v883 = vadd.f32 %v463, %v882
  %v884 = vpop.f32.mrf.mxu0
  %v885 = vadd.f32 %v463, %v884
  %886 = vmatmul.bf16.gmra.mxu0 %v349
  %v887 = vpop.f32.mrf.mxu0
  %v888 = vadd.f32 %v463, %v887
  %v889 = vpop.f32.mrf.mxu0
  %v890 = vadd.f32 %v463, %v889
  %891 = vmatmul.bf16.gmra.mxu0 %v356
  %v892 = vpop.f32.mrf.mxu0
  %v893 = vadd.f32 %v463, %v892
  %v894 = vpop.f32.mrf.mxu0
  %v895 = vadd.f32 %v463, %v894
  %896 = vdwg.mxu0
  %897 = vmatpush.bf16.msra.mxu0 %v676
  %898 = vmatpush.bf16.msra.mxu0 %v675
  %899 = vmatpush.bf16.msra.mxu0 %v674
  %900 = vmatpush.bf16.msra.mxu0 %v673
  %901 = vmatpush.bf16.msra.mxu0 %v672
  %902 = vmatpush.bf16.msra.mxu0 %v671
  %903 = vmatpush.bf16.msra.mxu0 %v670
  %904 = vmatpush.bf16.msra.mxu0 %v669
  %905 = vmatmul.bf16.gmra.mxu0 %v252
  %v906 = vpop.f32.mrf.mxu0
  %v907 = vadd.f32 %v818, %v906
  %v908 = vpop.f32.mrf.mxu0
  %v909 = vadd.f32 %v820, %v908
  %910 = vmatmul.bf16.gmra.mxu0 %v259
  %v911 = vpop.f32.mrf.mxu0
  %v912 = vadd.f32 %v823, %v911
  %v913 = vpop.f32.mrf.mxu0
  %v914 = vadd.f32 %v825, %v913
  %915 = vmatmul.bf16.gmra.mxu0 %v266
  %v916 = vpop.f32.mrf.mxu0
  %v917 = vadd.f32 %v828, %v916
  %v918 = vpop.f32.mrf.mxu0
  %v919 = vadd.f32 %v830, %v918
  %920 = vmatmul.bf16.gmra.mxu0 %v273
  %v921 = vpop.f32.mrf.mxu0
  %v922 = vadd.f32 %v833, %v921
  %v923 = vpop.f32.mrf.mxu0
  %v924 = vadd.f32 %v835, %v923
  %925 = vmatmul.bf16.gmra.mxu0 %v280
  %v926 = vpop.f32.mrf.mxu0
  %v927 = vadd.f32 %v838, %v926
  %v928 = vpop.f32.mrf.mxu0
  %v929 = vadd.f32 %v840, %v928
  %930 = vmatmul.bf16.gmra.mxu0 %v287
  %v931 = vpop.f32.mrf.mxu0
  %v932 = vadd.f32 %v843, %v931
  %v933 = vpop.f32.mrf.mxu0
  %v934 = vadd.f32 %v845, %v933
  %935 = vmatmul.bf16.gmra.mxu0 %v294
  %v936 = vpop.f32.mrf.mxu0
  %v937 = vadd.f32 %v848, %v936
  %v938 = vpop.f32.mrf.mxu0
  %v939 = vadd.f32 %v850, %v938
  %940 = vmatmul.bf16.gmra.mxu0 %v301
  %v941 = vpop.f32.mrf.mxu0
  %v942 = vadd.f32 %v853, %v941
  %v943 = vpop.f32.mrf.mxu0
  %v944 = vadd.f32 %v855, %v943
  %945 = vmatmul.bf16.gmra.mxu0 %v308
  %v946 = vpop.f32.mrf.mxu0
  %v947 = vadd.f32 %v858, %v946
  %v948 = vpop.f32.mrf.mxu0
  %v949 = vadd.f32 %v860, %v948
  %950 = vmatmul.bf16.gmra.mxu0 %v315
  %v951 = vpop.f32.mrf.mxu0
  %v952 = vadd.f32 %v863, %v951
  %v953 = vpop.f32.mrf.mxu0
  %v954 = vadd.f32 %v865, %v953
  %955 = vmatmul.bf16.gmra.mxu0 %v322
  %v956 = vpop.f32.mrf.mxu0
  %v957 = vadd.f32 %v868, %v956
  %v958 = vpop.f32.mrf.mxu0
  %v959 = vadd.f32 %v870, %v958
  %960 = vmatmul.bf16.gmra.mxu0 %v329
  %v961 = vpop.f32.mrf.mxu0
  %v962 = vadd.f32 %v873, %v961
  %v963 = vpop.f32.mrf.mxu0
  %v964 = vadd.f32 %v875, %v963
  %965 = vmatmul.bf16.gmra.mxu0 %v336
  %v966 = vpop.f32.mrf.mxu0
  %v967 = vadd.f32 %v878, %v966
  %v968 = vpop.f32.mrf.mxu0
  %v969 = vadd.f32 %v880, %v968
  %970 = vmatmul.bf16.gmra.mxu0 %v343
  %v971 = vpop.f32.mrf.mxu0
  %v972 = vadd.f32 %v883, %v971
  %v973 = vpop.f32.mrf.mxu0
  %v974 = vadd.f32 %v885, %v973
  %975 = vmatmul.bf16.gmra.mxu0 %v350
  %v976 = vpop.f32.mrf.mxu0
  %v977 = vadd.f32 %v888, %v976
  %v978 = vpop.f32.mrf.mxu0
  %v979 = vadd.f32 %v890, %v978
  %980 = vmatmul.bf16.gmra.mxu0 %v357
  %v981 = vpop.f32.mrf.mxu0
  %v982 = vadd.f32 %v893, %v981
  %v983 = vpop.f32.mrf.mxu0
  %v984 = vadd.f32 %v895, %v983
  %985 = vdwg.mxu0
  %986 = vmatpush.bf16.msra.mxu0 %v684
  %987 = vmatpush.bf16.msra.mxu0 %v683
  %988 = vmatpush.bf16.msra.mxu0 %v682
  %989 = vmatpush.bf16.msra.mxu0 %v681
  %990 = vmatpush.bf16.msra.mxu0 %v680
  %991 = vmatpush.bf16.msra.mxu0 %v679
  %992 = vmatpush.bf16.msra.mxu0 %v678
  %993 = vmatpush.bf16.msra.mxu0 %v677
  %994 = vmatmul.bf16.gmra.mxu0 %v253
  %v995 = vpop.f32.mrf.mxu0
  %v996 = vadd.f32 %v907, %v995
  %v997 = vpop.f32.mrf.mxu0
  %v998 = vadd.f32 %v909, %v997
  %999 = vmatmul.bf16.gmra.mxu0 %v260
  %v1000 = vpop.f32.mrf.mxu0
  %v1001 = vadd.f32 %v912, %v1000
  %v1002 = vpop.f32.mrf.mxu0
  %v1003 = vadd.f32 %v914, %v1002
  %1004 = vmatmul.bf16.gmra.mxu0 %v267
  %v1005 = vpop.f32.mrf.mxu0
  %v1006 = vadd.f32 %v917, %v1005
  %v1007 = vpop.f32.mrf.mxu0
  %v1008 = vadd.f32 %v919, %v1007
  %1009 = vmatmul.bf16.gmra.mxu0 %v274
  %v1010 = vpop.f32.mrf.mxu0
  %v1011 = vadd.f32 %v922, %v1010
  %v1012 = vpop.f32.mrf.mxu0
  %v1013 = vadd.f32 %v924, %v1012
  %1014 = vmatmul.bf16.gmra.mxu0 %v281
  %v1015 = vpop.f32.mrf.mxu0
  %v1016 = vadd.f32 %v927, %v1015
  %v1017 = vpop.f32.mrf.mxu0
  %v1018 = vadd.f32 %v929, %v1017
  %1019 = vmatmul.bf16.gmra.mxu0 %v288
  %v1020 = vpop.f32.mrf.mxu0
  %v1021 = vadd.f32 %v932, %v1020
  %v1022 = vpop.f32.mrf.mxu0
  %v1023 = vadd.f32 %v934, %v1022
  %1024 = vmatmul.bf16.gmra.mxu0 %v295
  %v1025 = vpop.f32.mrf.mxu0
  %v1026 = vadd.f32 %v937, %v1025
  %v1027 = vpop.f32.mrf.mxu0
  %v1028 = vadd.f32 %v939, %v1027
  %1029 = vmatmul.bf16.gmra.mxu0 %v302
  %v1030 = vpop.f32.mrf.mxu0
  %v1031 = vadd.f32 %v942, %v1030
  %v1032 = vpop.f32.mrf.mxu0
  %v1033 = vadd.f32 %v944, %v1032
  %1034 = vmatmul.bf16.gmra.mxu0 %v309
  %v1035 = vpop.f32.mrf.mxu0
  %v1036 = vadd.f32 %v947, %v1035
  %v1037 = vpop.f32.mrf.mxu0
  %v1038 = vadd.f32 %v949, %v1037
  %1039 = vmatmul.bf16.gmra.mxu0 %v316
  %v1040 = vpop.f32.mrf.mxu0
  %v1041 = vadd.f32 %v952, %v1040
  %v1042 = vpop.f32.mrf.mxu0
  %v1043 = vadd.f32 %v954, %v1042
  %1044 = vmatmul.bf16.gmra.mxu0 %v323
  %v1045 = vpop.f32.mrf.mxu0
  %v1046 = vadd.f32 %v957, %v1045
  %v1047 = vpop.f32.mrf.mxu0
  %v1048 = vadd.f32 %v959, %v1047
  %1049 = vmatmul.bf16.gmra.mxu0 %v330
  %v1050 = vpop.f32.mrf.mxu0
  %v1051 = vadd.f32 %v962, %v1050
  %v1052 = vpop.f32.mrf.mxu0
  %v1053 = vadd.f32 %v964, %v1052
  %1054 = vmatmul.bf16.gmra.mxu0 %v337
  %v1055 = vpop.f32.mrf.mxu0
  %v1056 = vadd.f32 %v967, %v1055
  %v1057 = vpop.f32.mrf.mxu0
  %v1058 = vadd.f32 %v969, %v1057
  %1059 = vmatmul.bf16.gmra.mxu0 %v344
  %v1060 = vpop.f32.mrf.mxu0
  %v1061 = vadd.f32 %v972, %v1060
  %v1062 = vpop.f32.mrf.mxu0
  %v1063 = vadd.f32 %v974, %v1062
  %1064 = vmatmul.bf16.gmra.mxu0 %v351
  %v1065 = vpop.f32.mrf.mxu0
  %v1066 = vadd.f32 %v977, %v1065
  %v1067 = vpop.f32.mrf.mxu0
  %v1068 = vadd.f32 %v979, %v1067
  %1069 = vmatmul.bf16.gmra.mxu0 %v358
  %v1070 = vpop.f32.mrf.mxu0
  %v1071 = vadd.f32 %v982, %v1070
  %v1072 = vpop.f32.mrf.mxu0
  %v1073 = vadd.f32 %v984, %v1072
  %1074 = vdwg.mxu0
  %1075 = vmatpush.bf16.msra.mxu0 %v692
  %1076 = vmatpush.bf16.msra.mxu0 %v691
  %1077 = vmatpush.bf16.msra.mxu0 %v690
  %1078 = vmatpush.bf16.msra.mxu0 %v689
  %1079 = vmatpush.bf16.msra.mxu0 %v688
  %1080 = vmatpush.bf16.msra.mxu0 %v687
  %1081 = vmatpush.bf16.msra.mxu0 %v686
  %1082 = vmatpush.bf16.msra.mxu0 %v685
  %1083 = vmatmul.bf16.gmra.mxu0 %v254
  %v1084 = vpop.f32.mrf.mxu0
  %v1085 = vadd.f32 %v996, %v1084
  %v1086 = vpop.f32.mrf.mxu0
  %v1087 = vadd.f32 %v998, %v1086
  %1088 = vmatmul.bf16.gmra.mxu0 %v261
  %v1089 = vpop.f32.mrf.mxu0
  %v1090 = vadd.f32 %v1001, %v1089
  %v1091 = vpop.f32.mrf.mxu0
  %v1092 = vadd.f32 %v1003, %v1091
  %1093 = vmatmul.bf16.gmra.mxu0 %v268
  %v1094 = vpop.f32.mrf.mxu0
  %v1095 = vadd.f32 %v1006, %v1094
  %v1096 = vpop.f32.mrf.mxu0
  %v1097 = vadd.f32 %v1008, %v1096
  %1098 = vmatmul.bf16.gmra.mxu0 %v275
  %v1099 = vpop.f32.mrf.mxu0
  %v1100 = vadd.f32 %v1011, %v1099
  %v1101 = vpop.f32.mrf.mxu0
  %v1102 = vadd.f32 %v1013, %v1101
  %1103 = vmatmul.bf16.gmra.mxu0 %v282
  %v1104 = vpop.f32.mrf.mxu0
  %v1105 = vadd.f32 %v1016, %v1104
  %v1106 = vpop.f32.mrf.mxu0
  %v1107 = vadd.f32 %v1018, %v1106
  %1108 = vmatmul.bf16.gmra.mxu0 %v289
  %v1109 = vpop.f32.mrf.mxu0
  %v1110 = vadd.f32 %v1021, %v1109
  %v1111 = vpop.f32.mrf.mxu0
  %v1112 = vadd.f32 %v1023, %v1111
  %1113 = vmatmul.bf16.gmra.mxu0 %v296
  %v1114 = vpop.f32.mrf.mxu0
  %v1115 = vadd.f32 %v1026, %v1114
  %v1116 = vpop.f32.mrf.mxu0
  %v1117 = vadd.f32 %v1028, %v1116
  %1118 = vmatmul.bf16.gmra.mxu0 %v303
  %v1119 = vpop.f32.mrf.mxu0
  %v1120 = vadd.f32 %v1031, %v1119
  %v1121 = vpop.f32.mrf.mxu0
  %v1122 = vadd.f32 %v1033, %v1121
  %1123 = vmatmul.bf16.gmra.mxu0 %v310
  %v1124 = vpop.f32.mrf.mxu0
  %v1125 = vadd.f32 %v1036, %v1124
  %v1126 = vpop.f32.mrf.mxu0
  %v1127 = vadd.f32 %v1038, %v1126
  %1128 = vmatmul.bf16.gmra.mxu0 %v317
  %v1129 = vpop.f32.mrf.mxu0
  %v1130 = vadd.f32 %v1041, %v1129
  %v1131 = vpop.f32.mrf.mxu0
  %v1132 = vadd.f32 %v1043, %v1131
  %1133 = vmatmul.bf16.gmra.mxu0 %v324
  %v1134 = vpop.f32.mrf.mxu0
  %v1135 = vadd.f32 %v1046, %v1134
  %v1136 = vpop.f32.mrf.mxu0
  %v1137 = vadd.f32 %v1048, %v1136
  %1138 = vmatmul.bf16.gmra.mxu0 %v331
  %v1139 = vpop.f32.mrf.mxu0
  %v1140 = vadd.f32 %v1051, %v1139
  %v1141 = vpop.f32.mrf.mxu0
  %v1142 = vadd.f32 %v1053, %v1141
  %1143 = vmatmul.bf16.gmra.mxu0 %v338
  %v1144 = vpop.f32.mrf.mxu0
  %v1145 = vadd.f32 %v1056, %v1144
  %v1146 = vpop.f32.mrf.mxu0
  %v1147 = vadd.f32 %v1058, %v1146
  %1148 = vmatmul.bf16.gmra.mxu0 %v345
  %v1149 = vpop.f32.mrf.mxu0
  %v1150 = vadd.f32 %v1061, %v1149
  %v1151 = vpop.f32.mrf.mxu0
  %v1152 = vadd.f32 %v1063, %v1151
  %1153 = vmatmul.bf16.gmra.mxu0 %v352
  %v1154 = vpop.f32.mrf.mxu0
  %v1155 = vadd.f32 %v1066, %v1154
  %v1156 = vpop.f32.mrf.mxu0
  %v1157 = vadd.f32 %v1068, %v1156
  %1158 = vmatmul.bf16.gmra.mxu0 %v359
  %v1159 = vpop.f32.mrf.mxu0
  %v1160 = vadd.f32 %v1071, %v1159
  %v1161 = vpop.f32.mrf.mxu0
  %v1162 = vadd.f32 %v1073, %v1161
  %1163 = vdwg.mxu0
  %1164 = vmatpush.bf16.msra.mxu0 %v700
  %1165 = vmatpush.bf16.msra.mxu0 %v699
  %1166 = vmatpush.bf16.msra.mxu0 %v698
  %1167 = vmatpush.bf16.msra.mxu0 %v697
  %1168 = vmatpush.bf16.msra.mxu0 %v696
  %1169 = vmatpush.bf16.msra.mxu0 %v695
  %1170 = vmatpush.bf16.msra.mxu0 %v694
  %1171 = vmatpush.bf16.msra.mxu0 %v693
  %1172 = vmatmul.bf16.gmra.mxu0 %v255
  %v1173 = vpop.f32.mrf.mxu0
  %v1174 = vadd.f32 %v1085, %v1173
  %v1175 = vpop.f32.mrf.mxu0
  %v1176 = vadd.f32 %v1087, %v1175
  %1177 = vmatmul.bf16.gmra.mxu0 %v262
  %v1178 = vpop.f32.mrf.mxu0
  %v1179 = vadd.f32 %v1090, %v1178
  %v1180 = vpop.f32.mrf.mxu0
  %v1181 = vadd.f32 %v1092, %v1180
  %1182 = vmatmul.bf16.gmra.mxu0 %v269
  %v1183 = vpop.f32.mrf.mxu0
  %v1184 = vadd.f32 %v1095, %v1183
  %v1185 = vpop.f32.mrf.mxu0
  %v1186 = vadd.f32 %v1097, %v1185
  %1187 = vmatmul.bf16.gmra.mxu0 %v276
  %v1188 = vpop.f32.mrf.mxu0
  %v1189 = vadd.f32 %v1100, %v1188
  %v1190 = vpop.f32.mrf.mxu0
  %v1191 = vadd.f32 %v1102, %v1190
  %1192 = vmatmul.bf16.gmra.mxu0 %v283
  %v1193 = vpop.f32.mrf.mxu0
  %v1194 = vadd.f32 %v1105, %v1193
  %v1195 = vpop.f32.mrf.mxu0
  %v1196 = vadd.f32 %v1107, %v1195
  %1197 = vmatmul.bf16.gmra.mxu0 %v290
  %v1198 = vpop.f32.mrf.mxu0
  %v1199 = vadd.f32 %v1110, %v1198
  %v1200 = vpop.f32.mrf.mxu0
  %v1201 = vadd.f32 %v1112, %v1200
  %1202 = vmatmul.bf16.gmra.mxu0 %v297
  %v1203 = vpop.f32.mrf.mxu0
  %v1204 = vadd.f32 %v1115, %v1203
  %v1205 = vpop.f32.mrf.mxu0
  %v1206 = vadd.f32 %v1117, %v1205
  %1207 = vmatmul.bf16.gmra.mxu0 %v304
  %v1208 = vpop.f32.mrf.mxu0
  %v1209 = vadd.f32 %v1120, %v1208
  %v1210 = vpop.f32.mrf.mxu0
  %v1211 = vadd.f32 %v1122, %v1210
  %1212 = vmatmul.bf16.gmra.mxu0 %v311
  %v1213 = vpop.f32.mrf.mxu0
  %v1214 = vadd.f32 %v1125, %v1213
  %v1215 = vpop.f32.mrf.mxu0
  %v1216 = vadd.f32 %v1127, %v1215
  %1217 = vmatmul.bf16.gmra.mxu0 %v318
  %v1218 = vpop.f32.mrf.mxu0
  %v1219 = vadd.f32 %v1130, %v1218
  %v1220 = vpop.f32.mrf.mxu0
  %v1221 = vadd.f32 %v1132, %v1220
  %1222 = vmatmul.bf16.gmra.mxu0 %v325
  %v1223 = vpop.f32.mrf.mxu0
  %v1224 = vadd.f32 %v1135, %v1223
  %v1225 = vpop.f32.mrf.mxu0
  %v1226 = vadd.f32 %v1137, %v1225
  %1227 = vmatmul.bf16.gmra.mxu0 %v332
  %v1228 = vpop.f32.mrf.mxu0
  %v1229 = vadd.f32 %v1140, %v1228
  %v1230 = vpop.f32.mrf.mxu0
  %v1231 = vadd.f32 %v1142, %v1230
  %1232 = vmatmul.bf16.gmra.mxu0 %v339
  %v1233 = vpop.f32.mrf.mxu0
  %v1234 = vadd.f32 %v1145, %v1233
  %v1235 = vpop.f32.mrf.mxu0
  %v1236 = vadd.f32 %v1147, %v1235
  %1237 = vmatmul.bf16.gmra.mxu0 %v346
  %v1238 = vpop.f32.mrf.mxu0
  %v1239 = vadd.f32 %v1150, %v1238
  %v1240 = vpop.f32.mrf.mxu0
  %v1241 = vadd.f32 %v1152, %v1240
  %1242 = vmatmul.bf16.gmra.mxu0 %v353
  %v1243 = vpop.f32.mrf.mxu0
  %v1244 = vadd.f32 %v1155, %v1243
  %v1245 = vpop.f32.mrf.mxu0
  %v1246 = vadd.f32 %v1157, %v1245
  %1247 = vmatmul.bf16.gmra.mxu0 %v360
  %v1248 = vpop.f32.mrf.mxu0
  %v1249 = vadd.f32 %v1160, %v1248
  %v1250 = vpop.f32.mrf.mxu0
  %v1251 = vadd.f32 %v1162, %v1250
  %1252 = vdwg.mxu0
  %1253 = vmatpush.bf16.msra.mxu0 %v708
  %1254 = vmatpush.bf16.msra.mxu0 %v707
  %1255 = vmatpush.bf16.msra.mxu0 %v706
  %1256 = vmatpush.bf16.msra.mxu0 %v705
  %1257 = vmatpush.bf16.msra.mxu0 %v704
  %1258 = vmatpush.bf16.msra.mxu0 %v703
  %1259 = vmatpush.bf16.msra.mxu0 %v702
  %1260 = vmatpush.bf16.msra.mxu0 %v701
  %1261 = vmatmul.bf16.gmra.mxu0 %v256
  %v1262 = vpop.f32.mrf.mxu0
  %v1263 = vadd.f32 %v1174, %v1262
  %v1264 = vpop.f32.mrf.mxu0
  %v1265 = vadd.f32 %v1176, %v1264
  %1266 = vmatmul.bf16.gmra.mxu0 %v263
  %v1267 = vpop.f32.mrf.mxu0
  %v1268 = vadd.f32 %v1179, %v1267
  %v1269 = vpop.f32.mrf.mxu0
  %v1270 = vadd.f32 %v1181, %v1269
  %1271 = vmatmul.bf16.gmra.mxu0 %v270
  %v1272 = vpop.f32.mrf.mxu0
  %v1273 = vadd.f32 %v1184, %v1272
  %v1274 = vpop.f32.mrf.mxu0
  %v1275 = vadd.f32 %v1186, %v1274
  %1276 = vmatmul.bf16.gmra.mxu0 %v277
  %v1277 = vpop.f32.mrf.mxu0
  %v1278 = vadd.f32 %v1189, %v1277
  %v1279 = vpop.f32.mrf.mxu0
  %v1280 = vadd.f32 %v1191, %v1279
  %1281 = vmatmul.bf16.gmra.mxu0 %v284
  %v1282 = vpop.f32.mrf.mxu0
  %v1283 = vadd.f32 %v1194, %v1282
  %v1284 = vpop.f32.mrf.mxu0
  %v1285 = vadd.f32 %v1196, %v1284
  %1286 = vmatmul.bf16.gmra.mxu0 %v291
  %v1287 = vpop.f32.mrf.mxu0
  %v1288 = vadd.f32 %v1199, %v1287
  %v1289 = vpop.f32.mrf.mxu0
  %v1290 = vadd.f32 %v1201, %v1289
  %1291 = vmatmul.bf16.gmra.mxu0 %v298
  %v1292 = vpop.f32.mrf.mxu0
  %v1293 = vadd.f32 %v1204, %v1292
  %v1294 = vpop.f32.mrf.mxu0
  %v1295 = vadd.f32 %v1206, %v1294
  %1296 = vmatmul.bf16.gmra.mxu0 %v305
  %v1297 = vpop.f32.mrf.mxu0
  %v1298 = vadd.f32 %v1209, %v1297
  %v1299 = vpop.f32.mrf.mxu0
  %v1300 = vadd.f32 %v1211, %v1299
  %1301 = vmatmul.bf16.gmra.mxu0 %v312
  %v1302 = vpop.f32.mrf.mxu0
  %v1303 = vadd.f32 %v1214, %v1302
  %v1304 = vpop.f32.mrf.mxu0
  %v1305 = vadd.f32 %v1216, %v1304
  %1306 = vmatmul.bf16.gmra.mxu0 %v319
  %v1307 = vpop.f32.mrf.mxu0
  %v1308 = vadd.f32 %v1219, %v1307
  %v1309 = vpop.f32.mrf.mxu0
  %v1310 = vadd.f32 %v1221, %v1309
  %1311 = vmatmul.bf16.gmra.mxu0 %v326
  %v1312 = vpop.f32.mrf.mxu0
  %v1313 = vadd.f32 %v1224, %v1312
  %v1314 = vpop.f32.mrf.mxu0
  %v1315 = vadd.f32 %v1226, %v1314
  %1316 = vmatmul.bf16.gmra.mxu0 %v333
  %v1317 = vpop.f32.mrf.mxu0
  %v1318 = vadd.f32 %v1229, %v1317
  %v1319 = vpop.f32.mrf.mxu0
  %v1320 = vadd.f32 %v1231, %v1319
  %1321 = vmatmul.bf16.gmra.mxu0 %v340
  %v1322 = vpop.f32.mrf.mxu0
  %v1323 = vadd.f32 %v1234, %v1322
  %v1324 = vpop.f32.mrf.mxu0
  %v1325 = vadd.f32 %v1236, %v1324
  %1326 = vmatmul.bf16.gmra.mxu0 %v347
  %v1327 = vpop.f32.mrf.mxu0
  %v1328 = vadd.f32 %v1239, %v1327
  %v1329 = vpop.f32.mrf.mxu0
  %v1330 = vadd.f32 %v1241, %v1329
  %1331 = vmatmul.bf16.gmra.mxu0 %v354
  %v1332 = vpop.f32.mrf.mxu0
  %v1333 = vadd.f32 %v1244, %v1332
  %v1334 = vpop.f32.mrf.mxu0
  %v1335 = vadd.f32 %v1246, %v1334
  %1336 = vmatmul.bf16.gmra.mxu0 %v361
  %v1337 = vpop.f32.mrf.mxu0
  %v1338 = vadd.f32 %v1249, %v1337
  %v1339 = vpop.f32.mrf.mxu0
  %v1340 = vadd.f32 %v1251, %v1339
  %1341 = vdwg.mxu0
  %1342 = vmatpush.bf16.msra.mxu0 0
  %1343 = vmatpush.bf16.msra.mxu0 0
  %1344 = vmatpush.bf16.msra.mxu0 0
  %1345 = vmatpush.bf16.msra.mxu0 0
  %1346 = vmatpush.bf16.msra.mxu0 0
  %1347 = vmatpush.bf16.msra.mxu0 0
  %1348 = vmatpush.bf16.msra.mxu0 0
  %1349 = vmatpush.bf16.msra.mxu0 %v709
  %1350 = vmatmul.bf16.gmra.mxu0 %v761
  %v1351 = vpop.f32.mrf.mxu0
  %v1352 = vadd.f32 %v1263, %v1351
  %v1353 = vpop.f32.mrf.mxu0
  %v1354 = vadd.f32 %v1265, %v1353
  %1355 = vmatmul.bf16.gmra.mxu0 %v764
  %v1356 = vpop.f32.mrf.mxu0
  %v1357 = vadd.f32 %v1268, %v1356
  %v1358 = vpop.f32.mrf.mxu0
  %v1359 = vadd.f32 %v1270, %v1358
  %1360 = vmatmul.bf16.gmra.mxu0 %v767
  %v1361 = vpop.f32.mrf.mxu0
  %v1362 = vadd.f32 %v1273, %v1361
  %v1363 = vpop.f32.mrf.mxu0
  %v1364 = vadd.f32 %v1275, %v1363
  %1365 = vmatmul.bf16.gmra.mxu0 %v770
  %v1366 = vpop.f32.mrf.mxu0
  %v1367 = vadd.f32 %v1278, %v1366
  %v1368 = vpop.f32.mrf.mxu0
  %v1369 = vadd.f32 %v1280, %v1368
  %1370 = vmatmul.bf16.gmra.mxu0 %v773
  %v1371 = vpop.f32.mrf.mxu0
  %v1372 = vadd.f32 %v1283, %v1371
  %v1373 = vpop.f32.mrf.mxu0
  %v1374 = vadd.f32 %v1285, %v1373
  %1375 = vmatmul.bf16.gmra.mxu0 %v776
  %v1376 = vpop.f32.mrf.mxu0
  %v1377 = vadd.f32 %v1288, %v1376
  %v1378 = vpop.f32.mrf.mxu0
  %v1379 = vadd.f32 %v1290, %v1378
  %1380 = vmatmul.bf16.gmra.mxu0 %v779
  %v1381 = vpop.f32.mrf.mxu0
  %v1382 = vadd.f32 %v1293, %v1381
  %v1383 = vpop.f32.mrf.mxu0
  %v1384 = vadd.f32 %v1295, %v1383
  %1385 = vmatmul.bf16.gmra.mxu0 %v782
  %v1386 = vpop.f32.mrf.mxu0
  %v1387 = vadd.f32 %v1298, %v1386
  %v1388 = vpop.f32.mrf.mxu0
  %v1389 = vadd.f32 %v1300, %v1388
  %1390 = vmatmul.bf16.gmra.mxu0 %v785
  %v1391 = vpop.f32.mrf.mxu0
  %v1392 = vadd.f32 %v1303, %v1391
  %v1393 = vpop.f32.mrf.mxu0
  %v1394 = vadd.f32 %v1305, %v1393
  %1395 = vmatmul.bf16.gmra.mxu0 %v788
  %v1396 = vpop.f32.mrf.mxu0
  %v1397 = vadd.f32 %v1308, %v1396
  %v1398 = vpop.f32.mrf.mxu0
  %v1399 = vadd.f32 %v1310, %v1398
  %1400 = vmatmul.bf16.gmra.mxu0 %v791
  %v1401 = vpop.f32.mrf.mxu0
  %v1402 = vadd.f32 %v1313, %v1401
  %v1403 = vpop.f32.mrf.mxu0
  %v1404 = vadd.f32 %v1315, %v1403
  %1405 = vmatmul.bf16.gmra.mxu0 %v794
  %v1406 = vpop.f32.mrf.mxu0
  %v1407 = vadd.f32 %v1318, %v1406
  %v1408 = vpop.f32.mrf.mxu0
  %v1409 = vadd.f32 %v1320, %v1408
  %1410 = vmatmul.bf16.gmra.mxu0 %v797
  %v1411 = vpop.f32.mrf.mxu0
  %v1412 = vadd.f32 %v1323, %v1411
  %v1413 = vpop.f32.mrf.mxu0
  %v1414 = vadd.f32 %v1325, %v1413
  %1415 = vmatmul.bf16.gmra.mxu0 %v800
  %v1416 = vpop.f32.mrf.mxu0
  %v1417 = vadd.f32 %v1328, %v1416
  %v1418 = vpop.f32.mrf.mxu0
  %v1419 = vadd.f32 %v1330, %v1418
  %1420 = vmatmul.bf16.gmra.mxu0 %v803
  %v1421 = vpop.f32.mrf.mxu0
  %v1422 = vadd.f32 %v1333, %v1421
  %v1423 = vpop.f32.mrf.mxu0
  %v1424 = vadd.f32 %v1335, %v1423
  %1425 = vmatmul.bf16.gmra.mxu0 %v806
  %v1426 = vpop.f32.mrf.mxu0
  %v1427 = vadd.f32 %v1338, %v1426
  %v1428 = vpop.f32.mrf.mxu0
  %v1429 = vadd.f32 %v1340, %v1428
  %1430 = vdwg.mxu0
  %v1431 = vmax.f32 %v1352, 0.0
  %v1432 = vmax.f32 %v1354, 0.0
  %v1433 = vmax.f32 %v1357, 0.0
  %v1434 = vmax.f32 %v1359, 0.0
  %v1435 = vmax.f32 %v1362, 0.0
  %v1436 = vmax.f32 %v1364, 0.0
  %v1437 = vmax.f32 %v1367, 0.0
  %v1438 = vmax.f32 %v1369, 0.0
  %v1439 = vmax.f32 %v1372, 0.0
  %v1440 = vmax.f32 %v1374, 0.0
  %v1441 = vmax.f32 %v1377, 0.0
  %v1442 = vmax.f32 %v1379, 0.0
  %v1443 = vmax.f32 %v1382, 0.0
  %v1444 = vmax.f32 %v1384, 0.0
  %v1445 = vmax.f32 %v1387, 0.0
  %v1446 = vmax.f32 %v1389, 0.0
  %v1447 = vmax.f32 %v1392, 0.0
  %v1448 = vmax.f32 %v1394, 0.0
  %v1449 = vmax.f32 %v1397, 0.0
  %v1450 = vmax.f32 %v1399, 0.0
  %v1451 = vmax.f32 %v1402, 0.0
  %v1452 = vmax.f32 %v1404, 0.0
  %v1453 = vmax.f32 %v1407, 0.0
  %v1454 = vmax.f32 %v1409, 0.0
  %v1455 = vmax.f32 %v1412, 0.0
  %v1456 = vmax.f32 %v1414, 0.0
  %v1457 = vmax.f32 %v1417, 0.0
  %v1458 = vmax.f32 %v1419, 0.0
  %v1459 = vmax.f32 %v1422, 0.0
  %v1460 = vmax.f32 %v1424, 0.0
  %v1461 = vmax.f32 %v1427, 0.0
  %v1462 = vmax.f32 %v1429, 0.0
  %v1463 = vpack.c.bf16 %v1432, %v1431
  %v1464 = vpack.c.bf16 %v1434, %v1433
  %v1465 = vpack.c.bf16 %v1436, %v1435
  %v1466 = vpack.c.bf16 %v1438, %v1437
  %v1467 = vpack.c.bf16 %v1440, %v1439
  %v1468 = vpack.c.bf16 %v1442, %v1441
  %v1469 = vpack.c.bf16 %v1444, %v1443
  %v1470 = vpack.c.bf16 %v1446, %v1445
  %v1471 = vpack.c.bf16 %v1448, %v1447
  %v1472 = vpack.c.bf16 %v1450, %v1449
  %v1473 = vpack.c.bf16 %v1452, %v1451
  %v1474 = vpack.c.bf16 %v1454, %v1453
  %v1475 = vpack.c.bf16 %v1456, %v1455
  %v1476 = vpack.c.bf16 %v1458, %v1457
  %v1477 = vpack.c.bf16 %v1460, %v1459
  %v1478 = vpack.c.bf16 %v1462, %v1461
  %v1479 = vld [vmem:[%s3] sm:$0xf]
  %v1480 = vld [vmem:[%s3 + $0x4] sm:$0xf]
  %v1481 = vld [vmem:[%s3 + $0x8] sm:$0xf]
  %v1482 = vld [vmem:[%s3 + $0xc] sm:$0xf]
  %v1483 = vld [vmem:[%s3 + $0x10] sm:$0xf]
  %v1484 = vld [vmem:[%s3 + $0x14] sm:$0xf]
  %v1485 = vld [vmem:[%s3 + $0x18] sm:$0xf]
  %v1486 = vld [vmem:[%s3 + $0x1c] sm:$0xf]
  %v1487 = vld [vmem:[%s3 + $0x20] sm:$0xf]
  %v1488 = vld [vmem:[%s3 + $0x24] sm:$0xf]
  %v1489 = vld [vmem:[%s3 + $0x28] sm:$0xf]
  %v1490 = vld [vmem:[%s3 + $0x2c] sm:$0xf]
  %v1491 = vld [vmem:[%s3 + $0x30] sm:$0xf]
  %v1492 = vld [vmem:[%s3 + $0x34] sm:$0xf]
  %v1493 = vld [vmem:[%s3 + $0x38] sm:$0xf]
  %v1494 = vld [vmem:[%s3 + $0x3c] sm:$0xf]
  %v1495 = vld [vmem:[%s4] sm:$0x1]
  %v1497 = vperm.slane %v1495, 0
  %v1515 = vunpack.c.l.b16 %v1479
  %v1516 = vunpack.c.l.b16 %v1480
  %v1517 = vunpack.c.l.b16 %v1481
  %v1518 = vunpack.c.l.b16 %v1482
  %v1519 = vunpack.c.l.b16 %v1483
  %v1520 = vunpack.c.l.b16 %v1484
  %v1521 = vunpack.c.l.b16 %v1485
  %v1522 = vunpack.c.l.b16 %v1486
  %v1523 = vunpack.c.l.b16 %v1487
  %v1524 = vunpack.c.l.b16 %v1488
  %v1525 = vunpack.c.l.b16 %v1489
  %v1526 = vunpack.c.l.b16 %v1490
  %v1527 = vunpack.c.l.b16 %v1491
  %v1528 = vunpack.c.l.b16 %v1492
  %v1529 = vunpack.c.l.b16 %v1493
  %v1530 = vunpack.c.l.b16 %v1494
  %v1531 = vpack.c.b16 %v1516, %v1515
  %v1532 = vpack.c.b16 %v1518, %v1517
  %v1533 = vpack.c.b16 %v1520, %v1519
  %v1534 = vpack.c.b16 %v1522, %v1521
  %v1535 = vpack.c.b16 %v1524, %v1523
  %v1536 = vpack.c.b16 %v1526, %v1525
  %v1537 = vpack.c.b16 %v1528, %v1527
  %v1538 = vpack.c.b16 %v1530, %v1529
  %1547 = vmatpush.bf16.msra.mxu0 %v1538
  %1548 = vmatpush.bf16.msra.mxu0 %v1537
  %1549 = vmatpush.bf16.msra.mxu0 %v1536
  %1550 = vmatpush.bf16.msra.mxu0 %v1535
  %1551 = vmatpush.bf16.msra.mxu0 %v1534
  %1552 = vmatpush.bf16.msra.mxu0 %v1533
  %1553 = vmatpush.bf16.msra.mxu0 %v1532
  %1554 = vmatpush.bf16.msra.mxu0 %v1531
  %1555 = vmatmul.bf16.gmra.mxu0 %v1463
  %v1556 = vpop.f32.mrf.mxu0
  %v1557 = vadd.f32 %v1497, %v1556
  %v1558 = vpop.f32.mrf.mxu0
  %v1559 = vadd.f32 %v1497, %v1558
  %1560 = vmatmul.bf16.gmra.mxu0 %v1464
  %v1561 = vpop.f32.mrf.mxu0
  %v1562 = vadd.f32 %v1497, %v1561
  %v1563 = vpop.f32.mrf.mxu0
  %v1564 = vadd.f32 %v1497, %v1563
  %1565 = vmatmul.bf16.gmra.mxu0 %v1465
  %v1566 = vpop.f32.mrf.mxu0
  %v1567 = vadd.f32 %v1497, %v1566
  %v1568 = vpop.f32.mrf.mxu0
  %v1569 = vadd.f32 %v1497, %v1568
  %1570 = vmatmul.bf16.gmra.mxu0 %v1466
  %v1571 = vpop.f32.mrf.mxu0
  %v1572 = vadd.f32 %v1497, %v1571
  %v1573 = vpop.f32.mrf.mxu0
  %v1574 = vadd.f32 %v1497, %v1573
  %1575 = vmatmul.bf16.gmra.mxu0 %v1467
  %v1576 = vpop.f32.mrf.mxu0
  %v1577 = vadd.f32 %v1497, %v1576
  %v1578 = vpop.f32.mrf.mxu0
  %v1579 = vadd.f32 %v1497, %v1578
  %1580 = vmatmul.bf16.gmra.mxu0 %v1468
  %v1581 = vpop.f32.mrf.mxu0
  %v1582 = vadd.f32 %v1497, %v1581
  %v1583 = vpop.f32.mrf.mxu0
  %v1584 = vadd.f32 %v1497, %v1583
  %1585 = vmatmul.bf16.gmra.mxu0 %v1469
  %v1586 = vpop.f32.mrf.mxu0
  %v1587 = vadd.f32 %v1497, %v1586
  %v1588 = vpop.f32.mrf.mxu0
  %v1589 = vadd.f32 %v1497, %v1588
  %1590 = vmatmul.bf16.gmra.mxu0 %v1470
  %v1591 = vpop.f32.mrf.mxu0
  %v1592 = vadd.f32 %v1497, %v1591
  %v1593 = vpop.f32.mrf.mxu0
  %v1594 = vadd.f32 %v1497, %v1593
  %1595 = vmatmul.bf16.gmra.mxu0 %v1471
  %v1596 = vpop.f32.mrf.mxu0
  %v1597 = vadd.f32 %v1497, %v1596
  %v1598 = vpop.f32.mrf.mxu0
  %v1599 = vadd.f32 %v1497, %v1598
  %1600 = vmatmul.bf16.gmra.mxu0 %v1472
  %v1601 = vpop.f32.mrf.mxu0
  %v1602 = vadd.f32 %v1497, %v1601
  %v1603 = vpop.f32.mrf.mxu0
  %v1604 = vadd.f32 %v1497, %v1603
  %1605 = vmatmul.bf16.gmra.mxu0 %v1473
  %v1606 = vpop.f32.mrf.mxu0
  %v1607 = vadd.f32 %v1497, %v1606
  %v1608 = vpop.f32.mrf.mxu0
  %v1609 = vadd.f32 %v1497, %v1608
  %1610 = vmatmul.bf16.gmra.mxu0 %v1474
  %v1611 = vpop.f32.mrf.mxu0
  %v1612 = vadd.f32 %v1497, %v1611
  %v1613 = vpop.f32.mrf.mxu0
  %v1614 = vadd.f32 %v1497, %v1613
  %1615 = vmatmul.bf16.gmra.mxu0 %v1475
  %v1616 = vpop.f32.mrf.mxu0
  %v1617 = vadd.f32 %v1497, %v1616
  %v1618 = vpop.f32.mrf.mxu0
  %v1619 = vadd.f32 %v1497, %v1618
  %1620 = vmatmul.bf16.gmra.mxu0 %v1476
  %v1621 = vpop.f32.mrf.mxu0
  %v1622 = vadd.f32 %v1497, %v1621
  %v1623 = vpop.f32.mrf.mxu0
  %v1624 = vadd.f32 %v1497, %v1623
  %1625 = vmatmul.bf16.gmra.mxu0 %v1477
  %v1626 = vpop.f32.mrf.mxu0
  %v1627 = vadd.f32 %v1497, %v1626
  %v1628 = vpop.f32.mrf.mxu0
  %v1629 = vadd.f32 %v1497, %v1628
  %1630 = vmatmul.bf16.gmra.mxu0 %v1478
  %v1631 = vpop.f32.mrf.mxu0
  %v1632 = vadd.f32 %v1497, %v1631
  %v1633 = vpop.f32.mrf.mxu0
  %v1634 = vadd.f32 %v1497, %v1633
  %1635 = vdwg.mxu0
  %v1636 = vmax.f32 %v1557, 0.0
  %v1637 = vmax.f32 %v1559, 0.0
  %v1638 = vmax.f32 %v1562, 0.0
  %v1639 = vmax.f32 %v1564, 0.0
  %v1640 = vmax.f32 %v1567, 0.0
  %v1641 = vmax.f32 %v1569, 0.0
  %v1642 = vmax.f32 %v1572, 0.0
  %v1643 = vmax.f32 %v1574, 0.0
  %v1644 = vmax.f32 %v1577, 0.0
  %v1645 = vmax.f32 %v1579, 0.0
  %v1646 = vmax.f32 %v1582, 0.0
  %v1647 = vmax.f32 %v1584, 0.0
  %v1648 = vmax.f32 %v1587, 0.0
  %v1649 = vmax.f32 %v1589, 0.0
  %v1650 = vmax.f32 %v1592, 0.0
  %v1651 = vmax.f32 %v1594, 0.0
  %v1652 = vmax.f32 %v1597, 0.0
  %v1653 = vmax.f32 %v1599, 0.0
  %v1654 = vmax.f32 %v1602, 0.0
  %v1655 = vmax.f32 %v1604, 0.0
  %v1656 = vmax.f32 %v1607, 0.0
  %v1657 = vmax.f32 %v1609, 0.0
  %v1658 = vmax.f32 %v1612, 0.0
  %v1659 = vmax.f32 %v1614, 0.0
  %v1660 = vmax.f32 %v1617, 0.0
  %v1661 = vmax.f32 %v1619, 0.0
  %v1662 = vmax.f32 %v1622, 0.0
  %v1663 = vmax.f32 %v1624, 0.0
  %v1664 = vmax.f32 %v1627, 0.0
  %v1665 = vmax.f32 %v1629, 0.0
  %v1666 = vmax.f32 %v1632, 0.0
  %v1667 = vmax.f32 %v1634, 0.0
  %v1668 = vpack.c.bf16 %v1637, %v1636
  %v1669 = vpack.c.bf16 %v1639, %v1638
  %v1670 = vpack.c.bf16 %v1641, %v1640
  %v1671 = vpack.c.bf16 %v1643, %v1642
  %v1672 = vpack.c.bf16 %v1645, %v1644
  %v1673 = vpack.c.bf16 %v1647, %v1646
  %v1674 = vpack.c.bf16 %v1649, %v1648
  %v1675 = vpack.c.bf16 %v1651, %v1650
  %v1676 = vpack.c.bf16 %v1653, %v1652
  %v1677 = vpack.c.bf16 %v1655, %v1654
  %v1678 = vpack.c.bf16 %v1657, %v1656
  %v1679 = vpack.c.bf16 %v1659, %v1658
  %v1680 = vpack.c.bf16 %v1661, %v1660
  %v1681 = vpack.c.bf16 %v1663, %v1662
  %v1682 = vpack.c.bf16 %v1665, %v1664
  %v1683 = vpack.c.bf16 %v1667, %v1666
  %v1684 = vld [vmem:[%s5] sm:$0xf]
  %v1685 = vld [vmem:[%s5 + $0x4] sm:$0xf]
  %v1686 = vld [vmem:[%s5 + $0x8] sm:$0xf]
  %v1687 = vld [vmem:[%s5 + $0xc] sm:$0xf]
  %v1688 = vld [vmem:[%s5 + $0x10] sm:$0xf]
  %v1689 = vld [vmem:[%s5 + $0x14] sm:$0xf]
  %v1690 = vld [vmem:[%s5 + $0x18] sm:$0xf]
  %v1691 = vld [vmem:[%s5 + $0x1c] sm:$0xf]
  %v1692 = vld [vmem:[%s5 + $0x20] sm:$0xf]
  %v1693 = vld [vmem:[%s5 + $0x24] sm:$0xf]
  %v1694 = vld [vmem:[%s5 + $0x28] sm:$0xf]
  %v1695 = vld [vmem:[%s5 + $0x2c] sm:$0xf]
  %v1696 = vld [vmem:[%s5 + $0x30] sm:$0xf]
  %v1697 = vld [vmem:[%s5 + $0x34] sm:$0xf]
  %v1698 = vld [vmem:[%s5 + $0x38] sm:$0xf]
  %v1699 = vld [vmem:[%s5 + $0x3c] sm:$0xf]
  %v1700 = vld [vmem:[%s6] sm:$0x1]
  %v1702 = vperm.slane %v1700, 0
  %v1720 = vunpack.c.l.b16 %v1684
  %v1721 = vunpack.c.l.b16 %v1685
  %v1722 = vunpack.c.l.b16 %v1686
  %v1723 = vunpack.c.l.b16 %v1687
  %v1724 = vunpack.c.l.b16 %v1688
  %v1725 = vunpack.c.l.b16 %v1689
  %v1726 = vunpack.c.l.b16 %v1690
  %v1727 = vunpack.c.l.b16 %v1691
  %v1728 = vunpack.c.l.b16 %v1692
  %v1729 = vunpack.c.l.b16 %v1693
  %v1730 = vunpack.c.l.b16 %v1694
  %v1731 = vunpack.c.l.b16 %v1695
  %v1732 = vunpack.c.l.b16 %v1696
  %v1733 = vunpack.c.l.b16 %v1697
  %v1734 = vunpack.c.l.b16 %v1698
  %v1735 = vunpack.c.l.b16 %v1699
  %v1736 = vpack.c.b16 %v1721, %v1720
  %v1737 = vpack.c.b16 %v1723, %v1722
  %v1738 = vpack.c.b16 %v1725, %v1724
  %v1739 = vpack.c.b16 %v1727, %v1726
  %v1740 = vpack.c.b16 %v1729, %v1728
  %v1741 = vpack.c.b16 %v1731, %v1730
  %v1742 = vpack.c.b16 %v1733, %v1732
  %v1743 = vpack.c.b16 %v1735, %v1734
  %1752 = vmatpush.bf16.msra.mxu0 %v1743
  %1753 = vmatpush.bf16.msra.mxu0 %v1742
  %1754 = vmatpush.bf16.msra.mxu0 %v1741
  %1755 = vmatpush.bf16.msra.mxu0 %v1740
  %1756 = vmatpush.bf16.msra.mxu0 %v1739
  %1757 = vmatpush.bf16.msra.mxu0 %v1738
  %1758 = vmatpush.bf16.msra.mxu0 %v1737
  %1759 = vmatpush.bf16.msra.mxu0 %v1736
  %1760 = vmatmul.bf16.gmra.mxu0 %v1668
  %v1761 = vpop.f32.mrf.mxu0
  %v1762 = vadd.f32 %v1702, %v1761
  %v1763 = vpop.f32.mrf.mxu0
  %v1764 = vadd.f32 %v1702, %v1763
  %1765 = vmatmul.bf16.gmra.mxu0 %v1669
  %v1766 = vpop.f32.mrf.mxu0
  %v1767 = vadd.f32 %v1702, %v1766
  %v1768 = vpop.f32.mrf.mxu0
  %v1769 = vadd.f32 %v1702, %v1768
  %1770 = vmatmul.bf16.gmra.mxu0 %v1670
  %v1771 = vpop.f32.mrf.mxu0
  %v1772 = vadd.f32 %v1702, %v1771
  %v1773 = vpop.f32.mrf.mxu0
  %v1774 = vadd.f32 %v1702, %v1773
  %1775 = vmatmul.bf16.gmra.mxu0 %v1671
  %v1776 = vpop.f32.mrf.mxu0
  %v1777 = vadd.f32 %v1702, %v1776
  %v1778 = vpop.f32.mrf.mxu0
  %v1779 = vadd.f32 %v1702, %v1778
  %1780 = vmatmul.bf16.gmra.mxu0 %v1672
  %v1781 = vpop.f32.mrf.mxu0
  %v1782 = vadd.f32 %v1702, %v1781
  %v1783 = vpop.f32.mrf.mxu0
  %v1784 = vadd.f32 %v1702, %v1783
  %1785 = vmatmul.bf16.gmra.mxu0 %v1673
  %v1786 = vpop.f32.mrf.mxu0
  %v1787 = vadd.f32 %v1702, %v1786
  %v1788 = vpop.f32.mrf.mxu0
  %v1789 = vadd.f32 %v1702, %v1788
  %1790 = vmatmul.bf16.gmra.mxu0 %v1674
  %v1791 = vpop.f32.mrf.mxu0
  %v1792 = vadd.f32 %v1702, %v1791
  %v1793 = vpop.f32.mrf.mxu0
  %v1794 = vadd.f32 %v1702, %v1793
  %1795 = vmatmul.bf16.gmra.mxu0 %v1675
  %v1796 = vpop.f32.mrf.mxu0
  %v1797 = vadd.f32 %v1702, %v1796
  %v1798 = vpop.f32.mrf.mxu0
  %v1799 = vadd.f32 %v1702, %v1798
  %1800 = vmatmul.bf16.gmra.mxu0 %v1676
  %v1801 = vpop.f32.mrf.mxu0
  %v1802 = vadd.f32 %v1702, %v1801
  %v1803 = vpop.f32.mrf.mxu0
  %v1804 = vadd.f32 %v1702, %v1803
  %1805 = vmatmul.bf16.gmra.mxu0 %v1677
  %v1806 = vpop.f32.mrf.mxu0
  %v1807 = vadd.f32 %v1702, %v1806
  %v1808 = vpop.f32.mrf.mxu0
  %v1809 = vadd.f32 %v1702, %v1808
  %1810 = vmatmul.bf16.gmra.mxu0 %v1678
  %v1811 = vpop.f32.mrf.mxu0
  %v1812 = vadd.f32 %v1702, %v1811
  %v1813 = vpop.f32.mrf.mxu0
  %v1814 = vadd.f32 %v1702, %v1813
  %1815 = vmatmul.bf16.gmra.mxu0 %v1679
  %v1816 = vpop.f32.mrf.mxu0
  %v1817 = vadd.f32 %v1702, %v1816
  %v1818 = vpop.f32.mrf.mxu0
  %v1819 = vadd.f32 %v1702, %v1818
  %1820 = vmatmul.bf16.gmra.mxu0 %v1680
  %v1821 = vpop.f32.mrf.mxu0
  %v1822 = vadd.f32 %v1702, %v1821
  %v1823 = vpop.f32.mrf.mxu0
  %v1824 = vadd.f32 %v1702, %v1823
  %1825 = vmatmul.bf16.gmra.mxu0 %v1681
  %v1826 = vpop.f32.mrf.mxu0
  %v1827 = vadd.f32 %v1702, %v1826
  %v1828 = vpop.f32.mrf.mxu0
  %v1829 = vadd.f32 %v1702, %v1828
  %1830 = vmatmul.bf16.gmra.mxu0 %v1682
  %v1831 = vpop.f32.mrf.mxu0
  %v1832 = vadd.f32 %v1702, %v1831
  %v1833 = vpop.f32.mrf.mxu0
  %v1834 = vadd.f32 %v1702, %v1833
  %1835 = vmatmul.bf16.gmra.mxu0 %v1683
  %v1836 = vpop.f32.mrf.mxu0
  %v1837 = vadd.f32 %v1702, %v1836
  %v1838 = vpop.f32.mrf.mxu0
  %v1839 = vadd.f32 %v1702, %v1838
  %1840 = vdwg.mxu0
  %1841 = vst [vmem:[%s7] sm:$0xff] %v1762
  %1842 = vst [vmem:[%s7 + $0x8] sm:$0xff] %v1764
  %1843 = vst [vmem:[%s7 + $0x10] sm:$0xff] %v1767
  %1844 = vst [vmem:[%s7 + $0x18] sm:$0xff] %v1769
  %1845 = vst [vmem:[%s7 + $0x20] sm:$0xff] %v1772
  %1846 = vst [vmem:[%s7 + $0x28] sm:$0xff] %v1774
  %1847 = vst [vmem:[%s7 + $0x30] sm:$0xff] %v1777
  %1848 = vst [vmem:[%s7 + $0x38] sm:$0xff] %v1779
  %1849 = vst [vmem:[%s7 + $0x40] sm:$0xff] %v1782
  %1850 = vst [vmem:[%s7 + $0x48] sm:$0xff] %v1784
  %1851 = vst [vmem:[%s7 + $0x50] sm:$0xff] %v1787
  %1852 = vst [vmem:[%s7 + $0x58] sm:$0xff] %v1789
  %1853 = vst [vmem:[%s7 + $0x60] sm:$0xff] %v1792
  %1854 = vst [vmem:[%s7 + $0x68] sm:$0xff] %v1794
  %1855 = vst [vmem:[%s7 + $0x70] sm:$0xff] %v1797
  %1856 = vst [vmem:[%s7 + $0x78] sm:$0xff] %v1799
  %1857 = vst [vmem:[%s7 + $0x80] sm:$0xff] %v1802
  %1858 = vst [vmem:[%s7 + $0x88] sm:$0xff] %v1804
  %1859 = vst [vmem:[%s7 + $0x90] sm:$0xff] %v1807
  %1860 = vst [vmem:[%s7 + $0x98] sm:$0xff] %v1809
  %1861 = vst [vmem:[%s7 + $0xa0] sm:$0xff] %v1812
  %1862 = vst [vmem:[%s7 + $0xa8] sm:$0xff] %v1814
  %1863 = vst [vmem:[%s7 + $0xb0] sm:$0xff] %v1817
  %1864 = vst [vmem:[%s7 + $0xb8] sm:$0xff] %v1819
  %1865 = vst [vmem:[%s7 + $0xc0] sm:$0xff] %v1822
  %1866 = vst [vmem:[%s7 + $0xc8] sm:$0xff] %v1824
  %1867 = vst [vmem:[%s7 + $0xd0] sm:$0xff] %v1827
  %1868 = vst [vmem:[%s7 + $0xd8] sm:$0xff] %v1829
  %1869 = vst [vmem:[%s7 + $0xe0] sm:$0xff] %v1832
  %1870 = vst [vmem:[%s7 + $0xe8] sm:$0xff] %v1834
  %1871 = vst [vmem:[%s7 + $0xf0] sm:$0xff] %v1837
  %1872 = vst [vmem:[%s7 + $0xf8] sm:$0xff] %v1839
  // Predicated region
  $region30: #{_forward_jit.1} parent=0 // pred_check
    _
  $region31: #{_forward_jit.1} parent=0 // pred_check_branch
    %1874 = sbr.rel (0) target = $region33
  $region32: #{_forward_jit.1} parent=0 // pred_region
    _
  $region33: #{_forward_jit.1} parent=0 // pred_fallthru
    _
  // Predicated region
  $region34: #{_forward_jit.1} parent=0 // pred_check
    _
  $region35: #{_forward_jit.1} parent=0 // pred_check_branch
    %1876 = sbr.rel (0) target = $region37
  $region36: #{_forward_jit.1} parent=0 // pred_region
    _
  $region37: #{_forward_jit.1} parent=0 // pred_fallthru
    _

</llo_original>
